<compile_context>
chip_gen: v6e
topology: v6e:2x2x1
jax: 0.10.0
libtpu: 0.0.40
codegen_flags: <defaults>
</compile_context>

<pallas_src>
import functools

import jax
import jax.numpy as jnp
from jax import lax
from jax.experimental import pallas as pl
from jax.experimental.pallas import tpu as pltpu


# ----------------------------------------------------------------------------
# Hardware awareness (safe fallbacks if the queries are unavailable).
# ----------------------------------------------------------------------------
def _vmem_capacity_bytes():
    try:
        return int(pltpu.get_tpu_info().vmem_capacity_bytes)
    except Exception:
        return 64 * 2 ** 20        # v7x per-core size: conservative everywhere


def _use_bf16_exp():
    # bf16 EUP exists on v6e / v7x; v5e (and older) keep the f32 exp path.
    try:
        kind = jax.devices()[0].device_kind.lower()
    except Exception:
        return False
    return any(tag in kind for tag in ("v6", "trillium", "v7"))


def _pick_tq(npad, c, cqp, vmem_cap, p_bytes, override):
    """Largest lane-dense query tile whose per-step VMEM footprint fits."""
    if override is not None:
        assert npad % override == 0, (npad, override)
        return int(override)
    budget = vmem_cap - 6 * 2 ** 20                       # Mosaic headroom
    resident = 2 * ((cqp + c) * npad * 2 + c * c * 2)     # k/v/attn_c (dbl, bf16)
    for cand in (1024, 512, 256, 128):
        if npad % cand:
            continue
        need = (resident
                + 2 * (cqp * cand * 2 + 2 * c * cand * 4)  # q / x / out tiles
                + npad * cand * (4 + p_bytes)              # energy + p
                + 4 * c * cand * 4                         # (C, TQ) f32 temps
                + (1 << 20))
        if need <= budget:
            return cand
    # Smallest lane-dense tile; for enormous N an online (flash-style) softmax
    # over KV chunks would be the next step.
    return 128


# ----------------------------------------------------------------------------
# Stage 1 kernel: per-batch Q/K/V projections + CAM channel-attention softmax.
# ----------------------------------------------------------------------------
def _proj_cam_kernel(x_ref, wqk_ref, bqk_ref, wv_ref, bv_ref,
                     q_ref, k_ref, v_ref, attnc_ref):
    x_f32 = x_ref[...]                                   # (C, Npad) f32
    x_bf = x_f32.astype(jnp.bfloat16)
    cqp = q_ref.shape[0]

    # One fused bf16 MXU push for Q and K (padded weight rows & biases are
    # exactly zero, so the PAM energy is numerically unchanged).
    qk = jnp.dot(wqk_ref[...], x_bf,
                 preferred_element_type=jnp.float32) + bqk_ref[...]
    q_ref[...] = qk[:cqp].astype(q_ref.dtype)
    k_ref[...] = qk[cqp:].astype(k_ref.dtype)

    v = jnp.dot(wv_ref[...], x_bf,
                preferred_element_type=jnp.float32) + bv_ref[...]
    v_ref[...] = v.astype(v_ref.dtype)

    # CAM channel attention (C, C). Energy stays f32 (it feeds an exponent).
    # Padded (zero) x columns contribute nothing to x x^T -> no mask needed.
    e_c = lax.dot_general(x_f32, x_f32,
                          dimension_numbers=(((1,), (1,)), ((), ())),
                          preferred_element_type=jnp.float32)          # (C, C)
    # softmax(rowmax(E) - E) == exp(rowmin(E) - E) / rowsum
    pc = jnp.exp(jnp.min(e_c, axis=-1, keepdims=True) - e_c)
    attn_c = pc * pl.reciprocal(jnp.sum(pc, axis=-1, keepdims=True),
                                approx=True)
    attnc_ref[...] = attn_c.astype(attnc_ref.dtype)


# ----------------------------------------------------------------------------
# Stage 2 kernel: query-tiled PAM softmax + PAM/CAM apply + residuals.
# ----------------------------------------------------------------------------
def _pam_cam_apply_kernel(gam_ref,            # SMEM (2,) [gamma_pam, gamma_cam]
                          q_ref,              # (Cqp, TQ)   bf16
                          k_ref,              # (Cqp, Npad) bf16
                          v_ref,              # (C, Npad)   bf16
                          attnc_ref,          # (C, C)      bf16
                          x_ref,              # (C, TQ)     f32
                          o_ref,              # (C, TQ)
                          *, n_valid, exp_dtype):
    # energy^T[j, i] = sum_c k[c, j] q[c, i]  -> (Npad, TQ); keys run along
    # sublanes so the softmax row-max / row-sum land directly as (1, TQ).
    energy = lax.dot_general(k_ref[...], q_ref[...],
                             dimension_numbers=(((0,), (0,)), ((), ())),
                             preferred_element_type=jnp.float32)
    npad = energy.shape[0]
    if n_valid < npad:                                   # mask padded KEY rows
        key_idx = lax.broadcasted_iota(jnp.int32, energy.shape, 0)
        energy = jnp.where(key_idx < n_valid, energy, -1e30)

    m = jnp.max(energy, axis=0, keepdims=True)                       # (1, TQ)
    p = jnp.exp((energy - m).astype(exp_dtype))          # bf16 exp on v6e/v7x
    denom = jnp.sum(p, axis=0, keepdims=True, dtype=jnp.float32)     # (1, TQ)

    # Un-normalized PAM apply; the softmax reciprocal (and gamma) is folded
    # into the (C, TQ) output instead of scaling the (Npad, TQ) slab.
    pam_un = jnp.dot(v_ref[...], p.astype(v_ref.dtype),
                     preferred_element_type=jnp.float32)             # (C, TQ)

    x_tile = x_ref[...].astype(jnp.float32)                          # (C, TQ)
    cam = jnp.dot(attnc_ref[...], x_tile.astype(attnc_ref.dtype),
                  preferred_element_type=jnp.float32)                # (C, TQ)

    g_pam = gam_ref[0]
    g_cam = gam_ref[1]
    inv = pl.reciprocal(denom, approx=True)                          # (1, TQ)
    # (g_pam*pam + x) + (g_cam*cam + x)
    o_ref[...] = (g_pam * pam_un * inv + g_cam * cam
                  + 2.0 * x_tile).astype(o_ref.dtype)


# ----------------------------------------------------------------------------
# Wrapper
# ----------------------------------------------------------------------------
@functools.partial(jax.jit, static_argnames=("tq",))
def pam_cam_layer(x_nchw, params, *, tq=None):
    """x_nchw: (B, C, H, W). Returns PAM(x) + CAM(x), shape (B, C, H, W)."""
    B, C, H, W = x_nchw.shape
    N = H * W
    npad = ((N + 127) // 128) * 128        # lane-dense stores, bounded temps
    cq = params["wq"].shape[0]
    cqp = ((cq + 15) // 16) * 16           # pad q/k channels to bf16 sublane tile

    vmem_cap = _vmem_capacity_bytes()
    use_bf16_exp = _use_bf16_exp()
    exp_dtype = jnp.bfloat16 if use_bf16_exp else jnp.float32
    p_bytes = 2 if use_bf16_exp else 4
    tq = _pick_tq(npad, C, cqp, vmem_cap, p_bytes, tq)
    nq = npad // tq
    headroom = 2 * 2 ** 20

    x_flat = x_nchw.reshape(B, C, N).astype(jnp.float32)
    if npad != N:
        x_flat = jnp.pad(x_flat, ((0, 0), (0, 0), (0, npad - N)))
    gammas = jnp.stack([params["gamma_pam"],
                        params["gamma_cam"]]).astype(jnp.float32)

    # Fused, zero-padded Q/K projection weights (bf16 operands, f32 biases).
    wqk = (jnp.zeros((2 * cqp, C), jnp.float32)
           .at[:cq].set(params["wq"]).at[cqp:cqp + cq].set(params["wk"])
           .astype(jnp.bfloat16))
    bqk = (jnp.zeros((2 * cqp, 1), jnp.float32)
           .at[:cq].set(params["bq"]).at[cqp:cqp + cq].set(params["bk"]))
    wv = params["wv"].astype(jnp.bfloat16)
    bv = params["bv"].astype(jnp.float32)

    # ---------------- stage 1: per-batch projections + CAM softmax ----------
    proj_need = (2 * C * npad * 4                                    # x (dbl)
                 + 2 * ((2 * cqp + C) * npad * 2 + C * C * 2)        # outs (dbl)
                 + ((2 * cqp + C) * C * 2 + (2 * cqp + C) * 4)       # weights
                 + ((2 * cqp + C) * npad + 2 * C * C) * 4            # f32 temps
                 + (2 << 20))
    proj_cost = pl.CostEstimate(
        flops=int(2 * B * ((2 * cqp) * C * npad + 2 * C * C * npad)),
        transcendentals=int(B * C * C),
        bytes_accessed=int(B * (C * npad * 4
                                + ((2 * cqp + C) * npad + C * C) * 2)))

    q_all, k_all, v_all, attnc_all = pl.pallas_call(
        _proj_cam_kernel,
        out_shape=(
            jax.ShapeDtypeStruct((B, cqp, npad), jnp.bfloat16),      # q
            jax.ShapeDtypeStruct((B, cqp, npad), jnp.bfloat16),      # k
            jax.ShapeDtypeStruct((B, C, npad), jnp.bfloat16),        # v
            jax.ShapeDtypeStruct((B, C, C), jnp.bfloat16),           # attn_c
        ),
        grid_spec=pltpu.PrefetchScalarGridSpec(
            num_scalar_prefetch=0,
            grid=(B,),
            in_specs=[
                pl.BlockSpec((None, C, npad), lambda b: (b, 0, 0)),  # x
                pl.BlockSpec((2 * cqp, C), lambda b: (0, 0)),        # wqk
                pl.BlockSpec((2 * cqp, 1), lambda b: (0, 0)),        # bqk
                pl.BlockSpec((C, C), lambda b: (0, 0)),              # wv
                pl.BlockSpec((C, 1), lambda b: (0, 0)),              # bv
            ],
            out_specs=[
                pl.BlockSpec((None, cqp, npad), lambda b: (b, 0, 0)),
                pl.BlockSpec((None, cqp, npad), lambda b: (b, 0, 0)),
                pl.BlockSpec((None, C, npad), lambda b: (b, 0, 0)),
                pl.BlockSpec((None, C, C), lambda b: (b, 0, 0)),
            ]),
        compiler_params=pltpu.CompilerParams(
            dimension_semantics=("parallel",),
            vmem_limit_bytes=int(min(vmem_cap - headroom,
                                     max(proj_need, 16 * 2 ** 20)))),
        cost_estimate=proj_cost,
    )(x_flat, wqk, bqk, wv, bv)

    # ---------------- stage 2: tiled PAM softmax + both applies -------------
    main_need = (2 * ((cqp + C) * npad * 2 + C * C * 2)              # k/v/attn_c
                 + 2 * (cqp * tq * 2 + 2 * C * tq * 4)               # q/x/out tiles
                 + npad * tq * (4 + p_bytes)                         # energy + p
                 + 4 * C * tq * 4                                    # (C,TQ) temps
                 + (2 << 20))
    main_cost = pl.CostEstimate(
        flops=int(2 * B * ((cqp + C) * npad * npad + C * C * npad)),
        transcendentals=int(B * npad * npad),
        bytes_accessed=int(B * (((2 * cqp + C) * npad + C * C) * 2
                                + 2 * C * npad * 4)))

    kernel = functools.partial(_pam_cam_apply_kernel,
                               n_valid=N, exp_dtype=exp_dtype)
    out_flat = pl.pallas_call(
        kernel,
        out_shape=jax.ShapeDtypeStruct((B, C, npad), x_nchw.dtype),
        grid_spec=pltpu.PrefetchScalarGridSpec(
            num_scalar_prefetch=0,
            grid=(B, nq),
            in_specs=[
                pl.BlockSpec(memory_space=pltpu.MemorySpace.SMEM),        # gammas
                pl.BlockSpec((None, cqp, tq), lambda b, i: (b, 0, i)),    # q tile
                pl.BlockSpec((None, cqp, npad), lambda b, i: (b, 0, 0)),  # k
                pl.BlockSpec((None, C, npad), lambda b, i: (b, 0, 0)),    # v
                pl.BlockSpec((None, C, C), lambda b, i: (b, 0, 0)),       # attn_c
                pl.BlockSpec((None, C, tq), lambda b, i: (b, 0, i)),      # x tile
            ],
            out_specs=pl.BlockSpec((None, C, tq), lambda b, i: (b, 0, i))),
        compiler_params=pltpu.CompilerParams(
            # Init is hoisted out -> every (b, i) tile is independent; both
            # axes parallel (megacore / v7x dual-TC friendly).
            dimension_semantics=("parallel", "parallel"),
            vmem_limit_bytes=int(min(vmem_cap - headroom,
                                     max(main_need, 16 * 2 ** 20)))),
        cost_estimate=main_cost,
    )(gammas, q_all, k_all, v_all, attnc_all, x_flat)

    return out_flat[:, :, :N].reshape(B, C, H, W)


# ----------------------------------------------------------------------------
# Pure-JAX reference mirroring the PyTorch forward (f32 everywhere).
# ----------------------------------------------------------------------------
def _reference(x_nchw, params):
    B, C, H, W = x_nchw.shape
    N = H * W
    x = x_nchw.reshape(B, C, N).astype(jnp.float32)

    # PAM
    q = jnp.einsum("qc,bcn->bqn", params["wq"], x) + params["bq"][None]
    k = jnp.einsum("qc,bcn->bqn", params["wk"], x) + params["bk"][None]
    v = jnp.einsum("oc,bcn->bon", params["wv"], x) + params["bv"][None]
    energy = jnp.einsum("bqi,bqj->bij", q, k)
    attn = jax.nn.softmax(energy, axis=-1)
    pam = jnp.einsum("bcj,bij->bci", v, attn)
    pam_out = params["gamma_pam"] * pam + x

    # CAM
    e_c = jnp.einsum("bcn,bdn->bcd", x, x)
    e_new = jnp.max(e_c, axis=-1, keepdims=True) - e_c
    attn_c = jax.nn.softmax(e_new, axis=-1)
    cam = jnp.einsum("bcd,bdn->bcn", attn_c, x)
    cam_out = params["gamma_cam"] * cam + x

    return (pam_out + cam_out).reshape(B, C, H, W)


def _init_params(key, in_ch):
    """Deterministic params matching PAM_Module(in_ch) + CAM_Module().
    (The real __init__ sets gamma = 0; nonzero values are used here so both
    attention paths are actually exercised.)"""
    cq = in_ch // 8
    ks = jax.random.split(key, 6)
    scale = 0.1
    return {
        "wq": scale * jax.random.normal(ks[0], (cq, in_ch), jnp.float32),
        "bq": scale * jax.random.normal(ks[1], (cq, 1), jnp.float32),
        "wk": scale * jax.random.normal(ks[2], (cq, in_ch), jnp.float32),
        "bk": scale * jax.random.normal(ks[3], (cq, 1), jnp.float32),
        "wv": scale * jax.random.normal(ks[4], (in_ch, in_ch), jnp.float32),
        "bv": scale * jax.random.normal(ks[5], (in_ch, 1), jnp.float32),
        "gamma_pam": jnp.float32(0.5),
        "gamma_cam": jnp.float32(0.25),
    }


if __name__ == "__main__":
    key = jax.random.PRNGKey(0)
    kx, kp = jax.random.split(key)

    # Case 1: B=2, C=16, 16x16 spatial (N=256); tq=128 -> 2 query tiles per
    # batch, exercising the multi-tile path (no padding needed).
    B, C, H, W = 2, 16, 16, 16
    x = jax.random.normal(kx, (B, C, H, W), jnp.float32)
    params = _init_params(kp, C)
    out = jax.block_until_ready(pam_cam_layer(x, params, tq=128))
    ref = _reference(x, params)
    assert out.shape == (B, C, H, W)
    # bf16 MXU operands + approx reciprocal -> tolerance loosened vs pure f32.
    assert jnp.allclose(out, ref, atol=2e-2, rtol=2e-2), (
        f"max abs err {jnp.max(jnp.abs(out - ref))}")

    # Case 2: 10x10 spatial (N=100 -> padded to 128); exercises the padded-key
    # masking path and the auto tile selection.
    x2 = jax.random.normal(jax.random.fold_in(kx, 1), (B, C, 10, 10),
                           jnp.float32)
    out2 = jax.block_until_ready(pam_cam_layer(x2, params))
    ref2 = _reference(x2, params)
    assert out2.shape == (B, C, 10, 10)
    assert jnp.allclose(out2, ref2, atol=2e-2, rtol=2e-2), (
        f"max abs err {jnp.max(jnp.abs(out2 - ref2))}")

    print("KERNEL_OK")
</pallas_src>

<mosaic_0001>
module attributes {stable_mosaic.version = 11 : i64} {
  func.func @_proj_cam_kernel(%arg0: i32, %arg1: memref<1x16x256xf32, #tpu.memory_space<vmem>>, %arg2: memref<32x16xbf16, #tpu.memory_space<vmem>>, %arg3: memref<32x1xf32, #tpu.memory_space<vmem>>, %arg4: memref<16x16xbf16, #tpu.memory_space<vmem>>, %arg5: memref<16x1xf32, #tpu.memory_space<vmem>>, %arg6: memref<1x16x256xbf16, #tpu.memory_space<vmem>>, %arg7: memref<1x16x256xbf16, #tpu.memory_space<vmem>>, %arg8: memref<1x16x256xbf16, #tpu.memory_space<vmem>>, %arg9: memref<1x16x16xbf16, #tpu.memory_space<vmem>>) attributes {dimension_semantics = [#tpu.dimension_semantics<parallel>], iteration_bounds = array<i64: 2>, scalar_prefetch = 0 : i64, scratch_operands = 0 : i64, tpu.core_type = #tpu.core_type<tc>, window_params = [{transform_indices = @transform_0, window_bounds = array<i64: 1, 16, 256>}, {pipeline_mode = #tpu.pipeline_mode<synchronous>, transform_indices = @transform_1, window_bounds = array<i64: 32, 16>}, {pipeline_mode = #tpu.pipeline_mode<synchronous>, transform_indices = @transform_2, window_bounds = array<i64: 32, 1>}, {pipeline_mode = #tpu.pipeline_mode<synchronous>, transform_indices = @transform_3, window_bounds = array<i64: 16, 16>}, {pipeline_mode = #tpu.pipeline_mode<synchronous>, transform_indices = @transform_4, window_bounds = array<i64: 16, 1>}, {transform_indices = @transform_5, window_bounds = array<i64: 1, 16, 256>}, {transform_indices = @transform_6, window_bounds = array<i64: 1, 16, 256>}, {transform_indices = @transform_7, window_bounds = array<i64: 1, 16, 256>}, {transform_indices = @transform_8, window_bounds = array<i64: 1, 16, 16>}]} {
    %c0 = arith.constant 0 : index
    %c0_0 = arith.constant 0 : index
    %c0_1 = arith.constant 0 : index
    %0 = vector.load %arg1[%c0, %c0_0, %c0_1] : memref<1x16x256xf32, #tpu.memory_space<vmem>>, vector<1x16x256xf32>
    %1 = vector.shape_cast %0 : vector<1x16x256xf32> to vector<16x256xf32>
    %2 = arith.truncf %1 : vector<16x256xf32> to vector<16x256xbf16>
    %c0_2 = arith.constant 0 : index
    %c0_3 = arith.constant 0 : index
    %3 = vector.load %arg2[%c0_2, %c0_3] : memref<32x16xbf16, #tpu.memory_space<vmem>>, vector<32x16xbf16>
    %cst = arith.constant dense<0.000000e+00> : vector<32x256xf32>
    %4 = tpu.matmul %3, %2, %cst {dimension_numbers = #tpu.dot_dimension_numbers<[1], [0], [0], [1], [0, 0, 1, 1], [], []>} : vector<32x16xbf16>, vector<16x256xbf16>, vector<32x256xf32> -> vector<32x256xf32>
    %c0_4 = arith.constant 0 : index
    %c0_5 = arith.constant 0 : index
    %5 = vector.load %arg3[%c0_4, %c0_5] : memref<32x1xf32, #tpu.memory_space<vmem>>, vector<32x1xf32>
    %6 = vector.broadcast %5 : vector<32x1xf32> to vector<32x256xf32>
    %7 = arith.addf %4, %6 : vector<32x256xf32>
    %8 = vector.extract_strided_slice %7 {offsets = [0, 0], sizes = [16, 256], strides = [1, 1]} : vector<32x256xf32> to vector<16x256xf32>
    %9 = arith.truncf %8 : vector<16x256xf32> to vector<16x256xbf16>
    %c0_6 = arith.constant 0 : index
    %c0_7 = arith.constant 0 : index
    %c0_8 = arith.constant 0 : index
    %10 = vector.load %arg6[%c0_6, %c0_7, %c0_8] : memref<1x16x256xbf16, #tpu.memory_space<vmem>>, vector<1x16x256xbf16>
    %11 = vector.shape_cast %10 : vector<1x16x256xbf16> to vector<16x256xbf16>
    %12 = vector.shape_cast %9 : vector<16x256xbf16> to vector<1x16x256xbf16>
    tpu.vector_store %arg6[%c0_6, %c0_7, %c0_8], %12 {strides = array<i32>} : memref<1x16x256xbf16, #tpu.memory_space<vmem>>, vector<1x16x256xbf16>,
    %13 = vector.extract_strided_slice %7 {offsets = [16, 0], sizes = [16, 256], strides = [1, 1]} : vector<32x256xf32> to vector<16x256xf32>
    %14 = arith.truncf %13 : vector<16x256xf32> to vector<16x256xbf16>
    %c0_9 = arith.constant 0 : index
    %c0_10 = arith.constant 0 : index
    %c0_11 = arith.constant 0 : index
    %15 = vector.load %arg7[%c0_9, %c0_10, %c0_11] : memref<1x16x256xbf16, #tpu.memory_space<vmem>>, vector<1x16x256xbf16>
    %16 = vector.shape_cast %15 : vector<1x16x256xbf16> to vector<16x256xbf16>
    %17 = vector.shape_cast %14 : vector<16x256xbf16> to vector<1x16x256xbf16>
    tpu.vector_store %arg7[%c0_9, %c0_10, %c0_11], %17 {strides = array<i32>} : memref<1x16x256xbf16, #tpu.memory_space<vmem>>, vector<1x16x256xbf16>,
    %c0_12 = arith.constant 0 : index
    %c0_13 = arith.constant 0 : index
    %18 = vector.load %arg4[%c0_12, %c0_13] : memref<16x16xbf16, #tpu.memory_space<vmem>>, vector<16x16xbf16>
    %cst_14 = arith.constant dense<0.000000e+00> : vector<16x256xf32>
    %19 = tpu.matmul %18, %2, %cst_14 {dimension_numbers = #tpu.dot_dimension_numbers<[1], [0], [0], [1], [0, 0, 1, 1], [], []>} : vector<16x16xbf16>, vector<16x256xbf16>, vector<16x256xf32> -> vector<16x256xf32>
    %c0_15 = arith.constant 0 : index
    %c0_16 = arith.constant 0 : index
    %20 = vector.load %arg5[%c0_15, %c0_16] : memref<16x1xf32, #tpu.memory_space<vmem>>, vector<16x1xf32>
    %21 = vector.broadcast %20 : vector<16x1xf32> to vector<16x256xf32>
    %22 = arith.addf %19, %21 : vector<16x256xf32>
    %23 = arith.truncf %22 : vector<16x256xf32> to vector<16x256xbf16>
    %c0_17 = arith.constant 0 : index
    %c0_18 = arith.constant 0 : index
    %c0_19 = arith.constant 0 : index
    %24 = vector.load %arg8[%c0_17, %c0_18, %c0_19] : memref<1x16x256xbf16, #tpu.memory_space<vmem>>, vector<1x16x256xbf16>
    %25 = vector.shape_cast %24 : vector<1x16x256xbf16> to vector<16x256xbf16>
    %26 = vector.shape_cast %23 : vector<16x256xbf16> to vector<1x16x256xbf16>
    tpu.vector_store %arg8[%c0_17, %c0_18, %c0_19], %26 {strides = array<i32>} : memref<1x16x256xbf16, #tpu.memory_space<vmem>>, vector<1x16x256xbf16>,
    %cst_20 = arith.constant dense<0.000000e+00> : vector<16x16xf32>
    %27 = tpu.matmul %1, %1, %cst_20 {dimension_numbers = #tpu.dot_dimension_numbers<[1], [1], [0], [0], [0, 0, 1, 0], [], []>} : vector<16x256xf32>, vector<16x256xf32>, vector<16x16xf32> -> vector<16x16xf32>
    %cst_21 = arith.constant dense<0x7F800000> : vector<16xf32>
    %28 = vector.multi_reduction <minimumf>, %27, %cst_21 [1] : vector<16x16xf32> to vector<16xf32>
    %29 = vector.shape_cast %28 : vector<16xf32> to vector<16x1xf32>
    %30 = vector.broadcast %29 : vector<16x1xf32> to vector<16x16xf32>
    %31 = arith.subf %30, %27 : vector<16x16xf32>
    %32 = math.exp %31 : vector<16x16xf32>
    %cst_22 = arith.constant dense<0.000000e+00> : vector<16xf32>
    %33 = vector.multi_reduction <add>, %32, %cst_22 [1] : vector<16x16xf32> to vector<16xf32>
    %34 = vector.shape_cast %33 : vector<16xf32> to vector<16x1xf32>
    %35 = tpu.reciprocal %34 {approx = true} : vector<16x1xf32> -> vector<16x1xf32>
    %36 = vector.broadcast %35 : vector<16x1xf32> to vector<16x16xf32>
    %37 = arith.mulf %32, %36 : vector<16x16xf32>
    %38 = arith.truncf %37 : vector<16x16xf32> to vector<16x16xbf16>
    %c0_23 = arith.constant 0 : index
    %c0_24 = arith.constant 0 : index
    %c0_25 = arith.constant 0 : index
    %39 = vector.load %arg9[%c0_23, %c0_24, %c0_25] : memref<1x16x16xbf16, #tpu.memory_space<vmem>>, vector<1x16x16xbf16>
    %40 = vector.shape_cast %39 : vector<1x16x16xbf16> to vector<16x16xbf16>
    %41 = vector.shape_cast %38 : vector<16x16xbf16> to vector<1x16x16xbf16>
    tpu.vector_store %arg9[%c0_23, %c0_24, %c0_25], %41 {strides = array<i32>} : memref<1x16x16xbf16, #tpu.memory_space<vmem>>, vector<1x16x16xbf16>,
    return
  }
  func.func @transform_0(%arg0: i32) -> (i32, i32, i32) {
    %c0_i32 = arith.constant 0 : i32
    %c0_i32_0 = arith.constant 0 : i32
    %c0_i32_1 = arith.constant 0 : i32
    return %arg0, %c0_i32, %c0_i32_0 : i32, i32, i32
  }
  func.func @transform_1(%arg0: i32) -> (i32, i32) {
    %c0_i32 = arith.constant 0 : i32
    %c0_i32_0 = arith.constant 0 : i32
    %c0_i32_1 = arith.constant 0 : i32
    return %c0_i32, %c0_i32_0 : i32, i32
  }
  func.func @transform_2(%arg0: i32) -> (i32, i32) {
    %c0_i32 = arith.constant 0 : i32
    %c0_i32_0 = arith.constant 0 : i32
    %c0_i32_1 = arith.constant 0 : i32
    return %c0_i32, %c0_i32_0 : i32, i32
  }
  func.func @transform_3(%arg0: i32) -> (i32, i32) {
    %c0_i32 = arith.constant 0 : i32
    %c0_i32_0 = arith.constant 0 : i32
    %c0_i32_1 = arith.constant 0 : i32
    return %c0_i32, %c0_i32_0 : i32, i32
  }
  func.func @transform_4(%arg0: i32) -> (i32, i32) {
    %c0_i32 = arith.constant 0 : i32
    %c0_i32_0 = arith.constant 0 : i32
    %c0_i32_1 = arith.constant 0 : i32
    return %c0_i32, %c0_i32_0 : i32, i32
  }
  func.func @transform_5(%arg0: i32) -> (i32, i32, i32) {
    %c0_i32 = arith.constant 0 : i32
    %c0_i32_0 = arith.constant 0 : i32
    %c0_i32_1 = arith.constant 0 : i32
    return %arg0, %c0_i32, %c0_i32_0 : i32, i32, i32
  }
  func.func @transform_6(%arg0: i32) -> (i32, i32, i32) {
    %c0_i32 = arith.constant 0 : i32
    %c0_i32_0 = arith.constant 0 : i32
    %c0_i32_1 = arith.constant 0 : i32
    return %arg0, %c0_i32, %c0_i32_0 : i32, i32, i32
  }
  func.func @transform_7(%arg0: i32) -> (i32, i32, i32) {
    %c0_i32 = arith.constant 0 : i32
    %c0_i32_0 = arith.constant 0 : i32
    %c0_i32_1 = arith.constant 0 : i32
    return %arg0, %c0_i32, %c0_i32_0 : i32, i32, i32
  }
  func.func @transform_8(%arg0: i32) -> (i32, i32, i32) {
    %c0_i32 = arith.constant 0 : i32
    %c0_i32_0 = arith.constant 0 : i32
    %c0_i32_1 = arith.constant 0 : i32
    return %arg0, %c0_i32, %c0_i32_0 : i32, i32, i32
  }
}

module attributes {stable_mosaic.version = 11 : i64} {
  func.func @_pam_cam_apply_kernel(%arg0: i32, %arg1: i32, %arg2: memref<2xf32, #tpu.memory_space<smem>>, %arg3: memref<1x16x128xbf16, #tpu.memory_space<vmem>>, %arg4: memref<1x16x256xbf16, #tpu.memory_space<vmem>>, %arg5: memref<1x16x256xbf16, #tpu.memory_space<vmem>>, %arg6: memref<1x16x16xbf16, #tpu.memory_space<vmem>>, %arg7: memref<1x16x128xf32, #tpu.memory_space<vmem>>, %arg8: memref<1x16x128xf32, #tpu.memory_space<vmem>>) attributes {dimension_semantics = [#tpu.dimension_semantics<parallel>, #tpu.dimension_semantics<parallel>], iteration_bounds = array<i64: 2, 2>, scalar_prefetch = 0 : i64, scratch_operands = 0 : i64, tpu.core_type = #tpu.core_type<tc>, window_params = [{transform_indices = @transform_0, window_bounds = array<i64: 2>}, {transform_indices = @transform_1, window_bounds = array<i64: 1, 16, 128>}, {transform_indices = @transform_2, window_bounds = array<i64: 1, 16, 256>}, {transform_indices = @transform_3, window_bounds = array<i64: 1, 16, 256>}, {transform_indices = @transform_4, window_bounds = array<i64: 1, 16, 16>}, {transform_indices = @transform_5, window_bounds = array<i64: 1, 16, 128>}, {transform_indices = @transform_6, window_bounds = array<i64: 1, 16, 128>}]} {
    %c0 = arith.constant 0 : index
    %c0_0 = arith.constant 0 : index
    %c0_1 = arith.constant 0 : index
    %0 = vector.load %arg4[%c0, %c0_0, %c0_1] : memref<1x16x256xbf16, #tpu.memory_space<vmem>>, vector<1x16x256xbf16>
    %1 = vector.shape_cast %0 : vector<1x16x256xbf16> to vector<16x256xbf16>
    %c0_2 = arith.constant 0 : index
    %c0_3 = arith.constant 0 : index
    %c0_4 = arith.constant 0 : index
    %2 = vector.load %arg3[%c0_2, %c0_3, %c0_4] : memref<1x16x128xbf16, #tpu.memory_space<vmem>>, vector<1x16x128xbf16>
    %3 = vector.shape_cast %2 : vector<1x16x128xbf16> to vector<16x128xbf16>
    %cst = arith.constant dense<0.000000e+00> : vector<256x128xf32>
    %4 = tpu.matmul %1, %3, %cst {dimension_numbers = #tpu.dot_dimension_numbers<[0], [0], [1], [1], [0, 1, 1, 1], [], []>} : vector<16x256xbf16>, vector<16x128xbf16>, vector<256x128xf32> -> vector<256x128xf32>
    %cst_5 = arith.constant dense<0xFF800000> : vector<128xf32>
    %5 = vector.multi_reduction <maximumf>, %4, %cst_5 [0] : vector<256x128xf32> to vector<128xf32>
    %6 = vector.shape_cast %5 : vector<128xf32> to vector<1x128xf32>
    %7 = vector.broadcast %6 : vector<1x128xf32> to vector<256x128xf32>
    %8 = arith.subf %4, %7 : vector<256x128xf32>
    %9 = math.exp %8 : vector<256x128xf32>
    %cst_6 = arith.constant dense<0.000000e+00> : vector<128xf32>
    %10 = vector.multi_reduction <add>, %9, %cst_6 [0] : vector<256x128xf32> to vector<128xf32>
    %11 = vector.shape_cast %10 : vector<128xf32> to vector<1x128xf32>
    %c0_7 = arith.constant 0 : index
    %c0_8 = arith.constant 0 : index
    %c0_9 = arith.constant 0 : index
    %12 = vector.load %arg5[%c0_7, %c0_8, %c0_9] : memref<1x16x256xbf16, #tpu.memory_space<vmem>>, vector<1x16x256xbf16>
    %13 = vector.shape_cast %12 : vector<1x16x256xbf16> to vector<16x256xbf16>
    %14 = arith.truncf %9 : vector<256x128xf32> to vector<256x128xbf16>
    %cst_10 = arith.constant dense<0.000000e+00> : vector<16x128xf32>
    %15 = tpu.matmul %13, %14, %cst_10 {dimension_numbers = #tpu.dot_dimension_numbers<[1], [0], [0], [1], [0, 0, 1, 1], [], []>} : vector<16x256xbf16>, vector<256x128xbf16>, vector<16x128xf32> -> vector<16x128xf32>
    %c0_11 = arith.constant 0 : index
    %c0_12 = arith.constant 0 : index
    %c0_13 = arith.constant 0 : index
    %16 = vector.load %arg7[%c0_11, %c0_12, %c0_13] : memref<1x16x128xf32, #tpu.memory_space<vmem>>, vector<1x16x128xf32>
    %17 = vector.shape_cast %16 : vector<1x16x128xf32> to vector<16x128xf32>
    %c0_14 = arith.constant 0 : index
    %c0_15 = arith.constant 0 : index
    %c0_16 = arith.constant 0 : index
    %18 = vector.load %arg6[%c0_14, %c0_15, %c0_16] : memref<1x16x16xbf16, #tpu.memory_space<vmem>>, vector<1x16x16xbf16>
    %19 = vector.shape_cast %18 : vector<1x16x16xbf16> to vector<16x16xbf16>
    %20 = arith.truncf %17 : vector<16x128xf32> to vector<16x128xbf16>
    %cst_17 = arith.constant dense<0.000000e+00> : vector<16x128xf32>
    %21 = tpu.matmul %19, %20, %cst_17 {dimension_numbers = #tpu.dot_dimension_numbers<[1], [0], [0], [1], [0, 0, 1, 1], [], []>} : vector<16x16xbf16>, vector<16x128xbf16>, vector<16x128xf32> -> vector<16x128xf32>
    %c0_18 = arith.constant 0 : index
    %22 = memref.load %arg2[%c0_18] : memref<2xf32, #tpu.memory_space<smem>>
    %c1 = arith.constant 1 : index
    %23 = memref.load %arg2[%c1] : memref<2xf32, #tpu.memory_space<smem>>
    %24 = tpu.reciprocal %11 {approx = true} : vector<1x128xf32> -> vector<1x128xf32>
    %25 = vector.broadcast %22 : f32 to vector<16x128xf32>
    %26 = arith.mulf %25, %15 : vector<16x128xf32>
    %27 = vector.broadcast %24 : vector<1x128xf32> to vector<16x128xf32>
    %28 = arith.mulf %26, %27 : vector<16x128xf32>
    %29 = vector.broadcast %23 : f32 to vector<16x128xf32>
    %30 = arith.mulf %29, %21 : vector<16x128xf32>
    %31 = arith.addf %28, %30 : vector<16x128xf32>
    %cst_19 = arith.constant 2.000000e+00 : f32
    %32 = vector.broadcast %cst_19 : f32 to vector<16x128xf32>
    %33 = arith.mulf %32, %17 : vector<16x128xf32>
    %34 = arith.addf %31, %33 : vector<16x128xf32>
    %c0_20 = arith.constant 0 : index
    %c0_21 = arith.constant 0 : index
    %c0_22 = arith.constant 0 : index
    %35 = vector.load %arg8[%c0_20, %c0_21, %c0_22] : memref<1x16x128xf32, #tpu.memory_space<vmem>>, vector<1x16x128xf32>
    %36 = vector.shape_cast %35 : vector<1x16x128xf32> to vector<16x128xf32>
    %37 = vector.shape_cast %34 : vector<16x128xf32> to vector<1x16x128xf32>
    tpu.vector_store %arg8[%c0_20, %c0_21, %c0_22], %37 {strides = array<i32>} : memref<1x16x128xf32, #tpu.memory_space<vmem>>, vector<1x16x128xf32>,
    return
  }
  func.func @transform_0(%arg0: i32, %arg1: i32) -> i32 {
    %c0_i32 = arith.constant 0 : i32
    %c0_i32_0 = arith.constant 0 : i32
    return %c0_i32 : i32
  }
  func.func @transform_1(%arg0: i32, %arg1: i32) -> (i32, i32, i32) {
    %c0_i32 = arith.constant 0 : i32
    %c0_i32_0 = arith.constant 0 : i32
    return %arg0, %c0_i32, %arg1 : i32, i32, i32
  }
  func.func @transform_2(%arg0: i32, %arg1: i32) -> (i32, i32, i32) {
    %c0_i32 = arith.constant 0 : i32
    %c0_i32_0 = arith.constant 0 : i32
    %c0_i32_1 = arith.constant 0 : i32
    return %arg0, %c0_i32, %c0_i32_0 : i32, i32, i32
  }
  func.func @transform_3(%arg0: i32, %arg1: i32) -> (i32, i32, i32) {
    %c0_i32 = arith.constant 0 : i32
    %c0_i32_0 = arith.constant 0 : i32
    %c0_i32_1 = arith.constant 0 : i32
    return %arg0, %c0_i32, %c0_i32_0 : i32, i32, i32
  }
  func.func @transform_4(%arg0: i32, %arg1: i32) -> (i32, i32, i32) {
    %c0_i32 = arith.constant 0 : i32
    %c0_i32_0 = arith.constant 0 : i32
    %c0_i32_1 = arith.constant 0 : i32
    return %arg0, %c0_i32, %c0_i32_0 : i32, i32, i32
  }
  func.func @transform_5(%arg0: i32, %arg1: i32) -> (i32, i32, i32) {
    %c0_i32 = arith.constant 0 : i32
    %c0_i32_0 = arith.constant 0 : i32
    return %arg0, %c0_i32, %arg1 : i32, i32, i32
  }
  func.func @transform_6(%arg0: i32, %arg1: i32) -> (i32, i32, i32) {
    %c0_i32 = arith.constant 0 : i32
    %c0_i32_0 = arith.constant 0 : i32
    return %arg0, %c0_i32, %arg1 : i32, i32, i32
  }
}

</mosaic_0001>

<llo_original>
// kernel: pam_cam_layer.3
$region0: #{pam_cam_layer.3}
  #allocation0 [shape = 'u32[]', space=smem, size = 0x4, offset = 0x4, fixed_abs, tag = 'smem constant byte address 0x4 - core index']
  #allocation1 [shape = 'u32[144,128]{1,0:T(1,128)}', space=vmem, size = 0x12000, scoped, tag = 'internal scratch']
  %s0 = inlined_call_operand.vmem [shape: f32[2], index: 0, kind: input, shape index: {}]
  %s1 = inlined_call_operand.vmem [shape: bf16[2,16,256], index: 1, kind: input, shape index: {}]
  %s2 = inlined_call_operand.vmem [shape: bf16[2,16,256], index: 2, kind: input, shape index: {}]
  %s3 = inlined_call_operand.vmem [shape: bf16[2,16,256], index: 3, kind: input, shape index: {}]
  %s4 = inlined_call_operand.vmem [shape: bf16[2,16,16], index: 4, kind: input, shape index: {}]
  %s5 = inlined_call_operand.vmem [shape: f32[2,16,256], index: 5, kind: input, shape index: {}]
  %s6 = inlined_call_operand.vmem [shape: f32[2,16,256], index: 6, kind: output, shape index: {}]
  %s7 = sld [smem:[#allocation0]]
  $region174: #{pam_cam_layer.3} parent=0
    _
  %s9 = ssub.s32 1, %s7
  %s10 = scalar_select 0, %s9, %s7
  $region1: #{pam_cam_layer.3} parent=0
    #allocation2 [shape = 'u8[512]{0}', space=smem, size = 0x200, scoped, tag = 'input window, operand 0, single buffered']
    #allocation3 [shape = 's32[2]{0}', space=sflag, size = 0x8, scoped, tag = 'scoped memory for pam_cam_layer.3']
    #allocation4 [shape = 'u8[8192]{0}', space=vmem, size = 0x2000, scoped, tag = 'input window, operand 1']
    #allocation5 [shape = 'u8[16384]{0}', space=vmem, size = 0x4000, scoped, tag = 'input window, operand 5']
    #allocation6 [shape = 'u8[16384]{0}', space=vmem, size = 0x4000, scoped, tag = 'output window, operand 0']
    %11 = vsyncpa [#allocation3], 0
    loop: start=0, step=1, limit=6
    $region2: #{pam_cam_layer.3} parent=1 // loop_pre_header
      _
    $region3: #{pam_cam_layer.3} parent=1 // loop_header
      %s13 = sphi 0, %s17
      %p14 = scmp.ge.s32.totalorder %s13, 6
      %s20 = sphi 0, %s32
      %s21 = sphi 0, %s28
      %s22 = sphi 0, %s20
      %s23 = sphi 0, %s21
      %s24 = sphi 0, %s22
      %s25 = sphi 0, %s23
      %s33 = sphi 0, %s33
      %s35 = sphi 0, %s33
      %s36 = sphi 0, %s35
      %s50 = sphi 0, %s36
      %s58 = sphi 0, %s60
      %s61 = sphi 0, %s58
      %s62 = sphi 0, %s61
      %s78 = sphi 0, %s62
      %s84 = sphi 0, %s86
      %s87 = sphi 0, %s84
      %s88 = sphi 0, %s87
      %s104 = sphi 0, %s88
      %s110 = sphi 0, %s112
      %s113 = sphi 0, %s110
      %s114 = sphi 0, %s113
      %s130 = sphi 0, %s114
      %s136 = sphi 0, %s138
      %s139 = sphi 0, %s136
      %s140 = sphi 0, %s139
      %s156 = sphi 0, %s140
      %s164 = sphi 0, %s166
      %s167 = sphi 0, %s164
      %s168 = sphi 0, %s167
      %s184 = sphi 0, %s168
      %s192 = sphi 0, %s194
      %s195 = sphi 0, %s192
      %s196 = sphi 0, %s195
      %s212 = sphi 0, %s196
    $region4: #{pam_cam_layer.3} parent=1 // loop_header_branch
      %16 = sbr.rel (%p14) target = $region8
    $region5: #{pam_cam_layer.3} parent=1 // loop_body
      %s18 = ssub.s32 %s13, 1
      %s19 = ssub.s32 %s13, 2
      %s26 = sadd.s32 1, %s21
      %p27 = scmp.ge.s32.totalorder %s26, 2
      %s28 = scalar_select %p27, 0, %s26
      %s29 = sadd.s32 1, %s20
      %s30 = scalar_select %p27, %s29, %s20
      %p31 = scmp.ge.s32.totalorder %s30, 2
      %s32 = scalar_select %p31, 0, %s30
      %s34 = sadd.s32 %s33, 1
      %p37 = scmp.eq.s32.totalorder %s13, 3
      %p38 = scmp.ne.s32.totalorder %s33, %s35
      %p39 = scmp.eq.s32.totalorder %s13, 0
      %p40 = por %p38, %p39
      %p41 = scmp.ne.s32.totalorder %s33, %s35
      %p42 = scmp.eq.s32.totalorder %s18, 3
      %p43 = por %p41, %p42
      %p44 = scmp.ne.s32.totalorder %s35, %s36
      %p45 = scmp.eq.s32.totalorder %s18, 0
      %p46 = por %p44, %p45
      %p47 = scmp.ne.s32.totalorder %s35, %s36
      %p48 = scmp.eq.s32.totalorder %s19, 3
      %p49 = por %p47, %p48
      %p51 = scmp.ne.s32.totalorder %s36, %s50
      %p52 = scmp.eq.s32.totalorder %s19, 0
      %p53 = por %p51, %p52
      %s54 = ssub.s32 %s20, %s32
      %s55 = ssub.s32 %s21, %s28
      %s56 = sor.u32 %s54, %s55
      %p57 = scmp.eq.s32.totalorder %s56, 0
      %s59 = sadd.s32 %s58, 1
      %s60 = scalar_select %p57, %s58, %s59
      %p63 = pneg %p57
      %p64 = scmp.eq.s32.totalorder %s13, 3
      %p65 = por %p63, %p64
      %p66 = scmp.ne.s32.totalorder %s58, %s61
      %p67 = scmp.eq.s32.totalorder %s13, 0
      %p68 = por %p66, %p67
      %p69 = scmp.ne.s32.totalorder %s58, %s61
      %p70 = scmp.eq.s32.totalorder %s18, 3
      %p71 = por %p69, %p70
      %p72 = scmp.ne.s32.totalorder %s61, %s62
      %p73 = scmp.eq.s32.totalorder %s18, 0
      %p74 = por %p72, %p73
      %p75 = scmp.ne.s32.totalorder %s61, %s62
      %p76 = scmp.eq.s32.totalorder %s19, 3
      %p77 = por %p75, %p76
      %p79 = scmp.ne.s32.totalorder %s62, %s78
      %p80 = scmp.eq.s32.totalorder %s19, 0
      %p81 = por %p79, %p80
      %s82 = ssub.s32 %s20, %s32
      %p83 = scmp.eq.s32.totalorder %s82, 0
      %s85 = sadd.s32 %s84, 1
      %s86 = scalar_select %p83, %s84, %s85
      %p89 = pneg %p83
      %p90 = scmp.eq.s32.totalorder %s13, 3
      %p91 = por %p89, %p90
      %p92 = scmp.ne.s32.totalorder %s84, %s87
      %p93 = scmp.eq.s32.totalorder %s13, 0
      %p94 = por %p92, %p93
      %p95 = scmp.ne.s32.totalorder %s84, %s87
      %p96 = scmp.eq.s32.totalorder %s18, 3
      %p97 = por %p95, %p96
      %p98 = scmp.ne.s32.totalorder %s87, %s88
      %p99 = scmp.eq.s32.totalorder %s18, 0
      %p100 = por %p98, %p99
      %p101 = scmp.ne.s32.totalorder %s87, %s88
      %p102 = scmp.eq.s32.totalorder %s19, 3
      %p103 = por %p101, %p102
      %p105 = scmp.ne.s32.totalorder %s88, %s104
      %p106 = scmp.eq.s32.totalorder %s19, 0
      %p107 = por %p105, %p106
      %s108 = ssub.s32 %s20, %s32
      %p109 = scmp.eq.s32.totalorder %s108, 0
      %s111 = sadd.s32 %s110, 1
      %s112 = scalar_select %p109, %s110, %s111
      %p115 = pneg %p109
      %p116 = scmp.eq.s32.totalorder %s13, 3
      %p117 = por %p115, %p116
      %p118 = scmp.ne.s32.totalorder %s110, %s113
      %p119 = scmp.eq.s32.totalorder %s13, 0
      %p120 = por %p118, %p119
      %p121 = scmp.ne.s32.totalorder %s110, %s113
      %p122 = scmp.eq.s32.totalorder %s18, 3
      %p123 = por %p121, %p122
      %p124 = scmp.ne.s32.totalorder %s113, %s114
      %p125 = scmp.eq.s32.totalorder %s18, 0
      %p126 = por %p124, %p125
      %p127 = scmp.ne.s32.totalorder %s113, %s114
      %p128 = scmp.eq.s32.totalorder %s19, 3
      %p129 = por %p127, %p128
      %p131 = scmp.ne.s32.totalorder %s114, %s130
      %p132 = scmp.eq.s32.totalorder %s19, 0
      %p133 = por %p131, %p132
      %s134 = ssub.s32 %s20, %s32
      %p135 = scmp.eq.s32.totalorder %s134, 0
      %s137 = sadd.s32 %s136, 1
      %s138 = scalar_select %p135, %s136, %s137
      %p141 = pneg %p135
      %p142 = scmp.eq.s32.totalorder %s13, 3
      %p143 = por %p141, %p142
      %p144 = scmp.ne.s32.totalorder %s136, %s139
      %p145 = scmp.eq.s32.totalorder %s13, 0
      %p146 = por %p144, %p145
      %p147 = scmp.ne.s32.totalorder %s136, %s139
      %p148 = scmp.eq.s32.totalorder %s18, 3
      %p149 = por %p147, %p148
      %p150 = scmp.ne.s32.totalorder %s139, %s140
      %p151 = scmp.eq.s32.totalorder %s18, 0
      %p152 = por %p150, %p151
      %p153 = scmp.ne.s32.totalorder %s139, %s140
      %p154 = scmp.eq.s32.totalorder %s19, 3
      %p155 = por %p153, %p154
      %p157 = scmp.ne.s32.totalorder %s140, %s156
      %p158 = scmp.eq.s32.totalorder %s19, 0
      %p159 = por %p157, %p158
      %s160 = ssub.s32 %s20, %s32
      %s161 = ssub.s32 %s21, %s28
      %s162 = sor.u32 %s160, %s161
      %p163 = scmp.eq.s32.totalorder %s162, 0
      %s165 = sadd.s32 %s164, 1
      %s166 = scalar_select %p163, %s164, %s165
      %p169 = pneg %p163
      %p170 = scmp.eq.s32.totalorder %s13, 3
      %p171 = por %p169, %p170
      %p172 = scmp.ne.s32.totalorder %s164, %s167
      %p173 = scmp.eq.s32.totalorder %s13, 0
      %p174 = por %p172, %p173
      %p175 = scmp.ne.s32.totalorder %s164, %s167
      %p176 = scmp.eq.s32.totalorder %s18, 3
      %p177 = por %p175, %p176
      %p178 = scmp.ne.s32.totalorder %s167, %s168
      %p179 = scmp.eq.s32.totalorder %s18, 0
      %p180 = por %p178, %p179
      %p181 = scmp.ne.s32.totalorder %s167, %s168
      %p182 = scmp.eq.s32.totalorder %s19, 3
      %p183 = por %p181, %p182
      %p185 = scmp.ne.s32.totalorder %s168, %s184
      %p186 = scmp.eq.s32.totalorder %s19, 0
      %p187 = por %p185, %p186
      %s188 = ssub.s32 %s20, %s32
      %s189 = ssub.s32 %s21, %s28
      %s190 = sor.u32 %s188, %s189
      %p191 = scmp.eq.s32.totalorder %s190, 0
      %s193 = sadd.s32 %s192, 1
      %s194 = scalar_select %p191, %s192, %s193
      %p197 = pneg %p191
      %p198 = scmp.eq.s32.totalorder %s13, 3
      %p199 = por %p197, %p198
      %p200 = scmp.ne.s32.totalorder %s192, %s195
      %p201 = scmp.eq.s32.totalorder %s13, 0
      %p202 = por %p200, %p201
      %p203 = scmp.ne.s32.totalorder %s192, %s195
      %p204 = scmp.eq.s32.totalorder %s18, 3
      %p205 = por %p203, %p204
      %p206 = scmp.ne.s32.totalorder %s195, %s196
      %p207 = scmp.eq.s32.totalorder %s18, 0
      %p208 = por %p206, %p207
      %p209 = scmp.ne.s32.totalorder %s195, %s196
      %p210 = scmp.eq.s32.totalorder %s19, 3
      %p211 = por %p209, %p210
      %p213 = scmp.ne.s32.totalorder %s196, %s212
      %p214 = scmp.eq.s32.totalorder %s19, 0
      %p215 = por %p213, %p214
      %p216 = scmp.le.s32.totalorder 1, %s13
      %p217 = scmp.lt.s32.totalorder %s13, 5
      %p218 = pnand %p216, %p217
      %p219 = pneg %p218
      // Predicated region
      $region9: #{pam_cam_layer.3} parent=5 // pred_check
        _
      $region10: #{pam_cam_layer.3} parent=5 // pred_check_branch
        %221 = sbr.rel (%p218) target = $region12
      $region11: #{pam_cam_layer.3} parent=5 // pred_region
        %s222 = ssub.s32 %s13, 1
        // Predicated region
        $region13: #{pam_cam_layer.3} parent=11 // pred_check
          %p223 = pneg %p46
        $region14: #{pam_cam_layer.3} parent=11 // pred_check_branch
          %225 = sbr.rel (%p223) target = $region16
        $region15: #{pam_cam_layer.3} parent=11 // pred_region
          %s227 = ssub.s32 16, 16
          %228 = vsyncadd [#allocation3], %s227
          %s230 = sshll.u32 %s0, 4
          %s231 = int_to_ptr.vmem [resolvable:$true] %s230
          %233 = dma.vmem_to_smem %s231, 16, [#allocation2], [#allocation3]
        $region16: #{pam_cam_layer.3} parent=11 // pred_fallthru
          _
      $region12: #{pam_cam_layer.3} parent=5 // pred_fallthru
        _
      %p234 = scmp.lt.s32.totalorder %s13, 4
      // Predicated region
      $region17: #{pam_cam_layer.3} parent=5 // pred_check
        %p235 = pneg %p234
      $region18: #{pam_cam_layer.3} parent=5 // pred_check_branch
        %237 = sbr.rel (%p235) target = $region20
      $region19: #{pam_cam_layer.3} parent=5 // pred_region
        // Predicated region
        $region21: #{pam_cam_layer.3} parent=19 // pred_check
          %p238 = pneg %p68
        $region22: #{pam_cam_layer.3} parent=19 // pred_check_branch
          %240 = sbr.rel (%p238) target = $region24
        $region23: #{pam_cam_layer.3} parent=19 // pred_region
          %s241 = sand.u32 %s58, 1
          %s242 = sand.u32 %s58, 1
          %s243 = smul.addr %s242, 8
          %s244 = scalar_lea.vmem [#allocation4], %s243
          %s245 = smul.addr %s20, 4
          %s246 = sadd.s32 %s21, %s245
          %s247 = smul.addr %s246, 4
          %s248 = scalar_lea.vmem %s1, %s247
          // Predicated region
          $region25: #{pam_cam_layer.3} parent=23 // pred_check
            _
          $region26: #{pam_cam_layer.3} parent=23 // pred_check_branch
            %250 = sbr.rel (0) target = $region28
          $region27: #{pam_cam_layer.3} parent=23 // pred_region
            // Predicated region
            $region29: #{pam_cam_layer.3} parent=27 // pred_check
              _
            $region30: #{pam_cam_layer.3} parent=27 // pred_check_branch
              %252 = sbr.rel target = $region32
            $region31: #{pam_cam_layer.3} parent=27 // pred_region
              // Predicated region
              $region44: #{pam_cam_layer.3} parent=31 // pred_check
                _
              $region45: #{pam_cam_layer.3} parent=31 // pred_check_branch
                %270 = sbr.rel (0) target = $region47
              $region46: #{pam_cam_layer.3} parent=31 // pred_region
                loop: start=0, step=1, limit=1
                $region48: #{pam_cam_layer.3} parent=46 // loop_pre_header
                  _
                $region49: #{pam_cam_layer.3} parent=46 // loop_header
                  %s272 = sphi 0, %s276
                  %p273 = scmp.ge.s32.totalorder %s272, 1
                  %s277 = sphi %s248, %s248
                  %s278 = sphi %s244, %s244
                $region50: #{pam_cam_layer.3} parent=46 // loop_header_branch
                  %275 = sbr.rel (%p273) target = $region54
                $region51: #{pam_cam_layer.3} parent=46 // loop_body
                  _
                $region52: #{pam_cam_layer.3} parent=46 // loop_footer
                  %s276 = sadd.s32 1, %s272
                $region53: #{pam_cam_layer.3} parent=46 // loop_footer_branch
                  %271 = sbr.rel target = $region49
                $region54: #{pam_cam_layer.3} parent=46 // loop_exit
                  _
                %s280 = ssub.s32 16, 1
                loop: start=0, step=1, limit=1
                $region55: #{pam_cam_layer.3} parent=46 // loop_pre_header
                  _
                $region56: #{pam_cam_layer.3} parent=46 // loop_header
                  %s282 = sphi 0, %s286
                  %p283 = scmp.ge.s32.totalorder %s282, 1
                  %s287 = sphi %s248, %s248
                  %s288 = sphi %s244, %s244
                $region57: #{pam_cam_layer.3} parent=46 // loop_header_branch
                  %285 = sbr.rel (%p283) target = $region61
                $region58: #{pam_cam_layer.3} parent=46 // loop_body
                  %v289 = vld [vmem:[%s287] sm:%s280]
                  %290 = vst [vmem:[%s288] sm:%s280] %v289
                  %v291 = vld [vmem:[%s287 + $0x8] sm:%s280]
                  %292 = vst [vmem:[%s288 + $0x4] sm:%s280] %v291
                $region59: #{pam_cam_layer.3} parent=46 // loop_footer
                  %s286 = sadd.s32 1, %s282
                $region60: #{pam_cam_layer.3} parent=46 // loop_footer_branch
                  %281 = sbr.rel target = $region56
                $region61: #{pam_cam_layer.3} parent=46 // loop_exit
                  _
              $region47: #{pam_cam_layer.3} parent=31 // pred_fallthru
                _
            $region32: #{pam_cam_layer.3} parent=27 // pred_fallthru
              _
            // Predicated region
            $region33: #{pam_cam_layer.3} parent=27 // pred_check
              _
            $region34: #{pam_cam_layer.3} parent=27 // pred_check_branch
              %254 = sbr.rel (0) target = $region36
            $region35: #{pam_cam_layer.3} parent=27 // pred_region
              %s256 = ssub.s32 16, 1
              loop: start=0, step=1, limit=1
              $region37: #{pam_cam_layer.3} parent=35 // loop_pre_header
                _
              $region38: #{pam_cam_layer.3} parent=35 // loop_header
                %s258 = sphi 0, %s262
                %p259 = scmp.ge.s32.totalorder %s258, 1
                %s263 = sphi %s248, %s248
                %s264 = sphi %s244, %s244
              $region39: #{pam_cam_layer.3} parent=35 // loop_header_branch
                %261 = sbr.rel (%p259) target = $region43
              $region40: #{pam_cam_layer.3} parent=35 // loop_body
                %v265 = vld [vmem:[%s263] sm:%s256]
                %266 = vst [vmem:[%s264] sm:%s256] %v265
                %v267 = vld [vmem:[%s263 + $0x8] sm:%s256]
                %268 = vst [vmem:[%s264 + $0x4] sm:%s256] %v267
              $region41: #{pam_cam_layer.3} parent=35 // loop_footer
                %s262 = sadd.s32 1, %s258
              $region42: #{pam_cam_layer.3} parent=35 // loop_footer_branch
                %257 = sbr.rel target = $region38
              $region43: #{pam_cam_layer.3} parent=35 // loop_exit
                _
            $region36: #{pam_cam_layer.3} parent=27 // pred_fallthru
              _
          $region28: #{pam_cam_layer.3} parent=23 // pred_fallthru
            _
          %293 = vnop
        $region24: #{pam_cam_layer.3} parent=19 // pred_fallthru
          _
        // Predicated region
        $region62: #{pam_cam_layer.3} parent=19 // pred_check
          %p294 = pneg %p94
        $region63: #{pam_cam_layer.3} parent=19 // pred_check_branch
          %296 = sbr.rel (%p294) target = $region65
        $region64: #{pam_cam_layer.3} parent=19 // pred_region
          %p297 = scmp.lt.s32.totalorder %s20, 1
          %s298 = scalar_select %p297, %s20, 1
          %s299 = smul.addr %s298, 4
          %s300 = smul.addr %s299, 4
          %s301 = scalar_lea.vmem %s2, %s300
        $region65: #{pam_cam_layer.3} parent=19 // pred_fallthru
          _
        // Predicated region
        $region66: #{pam_cam_layer.3} parent=19 // pred_check
          %p302 = pneg %p120
        $region67: #{pam_cam_layer.3} parent=19 // pred_check_branch
          %304 = sbr.rel (%p302) target = $region69
        $region68: #{pam_cam_layer.3} parent=19 // pred_region
          %p305 = scmp.lt.s32.totalorder %s20, 1
          %s306 = scalar_select %p305, %s20, 1
          %s307 = smul.addr %s306, 4
          %s308 = smul.addr %s307, 4
          %s309 = scalar_lea.vmem %s3, %s308
        $region69: #{pam_cam_layer.3} parent=19 // pred_fallthru
          _
        // Predicated region
        $region70: #{pam_cam_layer.3} parent=19 // pred_check
          %p310 = pneg %p146
        $region71: #{pam_cam_layer.3} parent=19 // pred_check_branch
          %312 = sbr.rel (%p310) target = $region73
        $region72: #{pam_cam_layer.3} parent=19 // pred_region
          %p313 = scmp.lt.s32.totalorder %s20, 1
          %s314 = scalar_select %p313, %s20, 1
          %s315 = smul.addr %s314, 2
          %s316 = smul.addr %s315, 4
          %s317 = scalar_lea.vmem %s4, %s316
        $region73: #{pam_cam_layer.3} parent=19 // pred_fallthru
          _
        // Predicated region
        $region74: #{pam_cam_layer.3} parent=19 // pred_check
          %p318 = pneg %p174
        $region75: #{pam_cam_layer.3} parent=19 // pred_check_branch
          %320 = sbr.rel (%p318) target = $region77
        $region76: #{pam_cam_layer.3} parent=19 // pred_region
          %s321 = sand.u32 %s164, 1
          %s322 = sand.u32 %s164, 1
          %s323 = smul.addr %s322, 16
          %s324 = scalar_lea.vmem [#allocation5], %s323
          %s325 = smul.addr %s20, 4
          %s326 = sadd.s32 %s21, %s325
          %s327 = smul.addr %s326, 8
          %s328 = scalar_lea.vmem %s5, %s327
          // Predicated region
          $region78: #{pam_cam_layer.3} parent=76 // pred_check
            _
          $region79: #{pam_cam_layer.3} parent=76 // pred_check_branch
            %330 = sbr.rel (0) target = $region81
          $region80: #{pam_cam_layer.3} parent=76 // pred_region
            // Predicated region
            $region82: #{pam_cam_layer.3} parent=80 // pred_check
              _
            $region83: #{pam_cam_layer.3} parent=80 // pred_check_branch
              %332 = sbr.rel (0) target = $region85
            $region84: #{pam_cam_layer.3} parent=80 // pred_region
              // Predicated region
              $region97: #{pam_cam_layer.3} parent=84 // pred_check
                _
              $region98: #{pam_cam_layer.3} parent=84 // pred_check_branch
                %350 = sbr.rel (0) target = $region100
              $region99: #{pam_cam_layer.3} parent=84 // pred_region
                loop: start=0, step=1, limit=1
                $region101: #{pam_cam_layer.3} parent=99 // loop_pre_header
                  _
                $region102: #{pam_cam_layer.3} parent=99 // loop_header
                  %s352 = sphi 0, %s356
                  %p353 = scmp.ge.s32.totalorder %s352, 1
                  %s357 = sphi %s328, %s328
                  %s358 = sphi %s324, %s324
                $region103: #{pam_cam_layer.3} parent=99 // loop_header_branch
                  %355 = sbr.rel (%p353) target = $region107
                $region104: #{pam_cam_layer.3} parent=99 // loop_body
                  %v359 = vld [vmem:[%s357] sm:$0xff]
                  %360 = vst [vmem:[%s358] sm:$0xff] %v359
                  %v361 = vld [vmem:[%s357 + $0x10] sm:$0xff]
                  %362 = vst [vmem:[%s358 + $0x8] sm:$0xff] %v361
                $region105: #{pam_cam_layer.3} parent=99 // loop_footer
                  %s356 = sadd.s32 1, %s352
                $region106: #{pam_cam_layer.3} parent=99 // loop_footer_branch
                  %351 = sbr.rel target = $region102
                $region107: #{pam_cam_layer.3} parent=99 // loop_exit
                  _
              $region100: #{pam_cam_layer.3} parent=84 // pred_fallthru
                _
              // Predicated region
              $region108: #{pam_cam_layer.3} parent=84 // pred_check
                _
              $region109: #{pam_cam_layer.3} parent=84 // pred_check_branch
                %364 = sbr.rel target = $region111
              $region110: #{pam_cam_layer.3} parent=84 // pred_region
                _
              $region111: #{pam_cam_layer.3} parent=84 // pred_fallthru
                _
            $region85: #{pam_cam_layer.3} parent=80 // pred_fallthru
              _
            // Predicated region
            $region86: #{pam_cam_layer.3} parent=80 // pred_check
              _
            $region87: #{pam_cam_layer.3} parent=80 // pred_check_branch
              %334 = sbr.rel target = $region89
            $region88: #{pam_cam_layer.3} parent=80 // pred_region
              %s336 = ssub.s32 256, 1
              loop: start=0, step=1, limit=1
              $region90: #{pam_cam_layer.3} parent=88 // loop_pre_header
                _
              $region91: #{pam_cam_layer.3} parent=88 // loop_header
                %s338 = sphi 0, %s342
                %p339 = scmp.ge.s32.totalorder %s338, 1
                %s343 = sphi %s328, %s328
                %s344 = sphi %s324, %s324
              $region92: #{pam_cam_layer.3} parent=88 // loop_header_branch
                %341 = sbr.rel (%p339) target = $region96
              $region93: #{pam_cam_layer.3} parent=88 // loop_body
                %v345 = vld [vmem:[%s343] sm:%s336]
                %346 = vst [vmem:[%s344] sm:%s336] %v345
                %v347 = vld [vmem:[%s343 + $0x10] sm:%s336]
                %348 = vst [vmem:[%s344 + $0x8] sm:%s336] %v347
              $region94: #{pam_cam_layer.3} parent=88 // loop_footer
                %s342 = sadd.s32 1, %s338
              $region95: #{pam_cam_layer.3} parent=88 // loop_footer_branch
                %337 = sbr.rel target = $region91
              $region96: #{pam_cam_layer.3} parent=88 // loop_exit
                _
            $region89: #{pam_cam_layer.3} parent=80 // pred_fallthru
              _
          $region81: #{pam_cam_layer.3} parent=76 // pred_fallthru
            _
          %365 = vnop
        $region77: #{pam_cam_layer.3} parent=19 // pred_fallthru
          _
      $region20: #{pam_cam_layer.3} parent=5 // pred_fallthru
        _
      %p366 = scmp.le.s32.totalorder 1, %s13
      %p367 = scmp.lt.s32.totalorder %s13, 5
      %p368 = pnand %p366, %p367
      %p369 = pneg %p368
      // Predicated region
      $region112: #{pam_cam_layer.3} parent=5 // pred_check
        _
      $region113: #{pam_cam_layer.3} parent=5 // pred_check_branch
        %371 = sbr.rel (%p368) target = $region115
      $region114: #{pam_cam_layer.3} parent=5 // pred_region
        %s372 = ssub.s32 %s13, 1
        // Predicated region
        $region116: #{pam_cam_layer.3} parent=114 // pred_check
          %p373 = pneg %p46
        $region117: #{pam_cam_layer.3} parent=114 // pred_check_branch
          %375 = sbr.rel (%p373) target = $region119
        $region118: #{pam_cam_layer.3} parent=114 // pred_region
          %376 = dma.done [#allocation3], 16
        $region119: #{pam_cam_layer.3} parent=114 // pred_fallthru
          _
        %s377 = sand.u32 %s61, 1
        %s378 = sand.u32 %s61, 1
        %s379 = smul.addr %s378, 8
        %s380 = scalar_lea.vmem [#allocation4], %s379
        // Predicated region
        $region120: #{pam_cam_layer.3} parent=114 // pred_check
          %p381 = pneg %p74
        $region121: #{pam_cam_layer.3} parent=114 // pred_check_branch
          %383 = sbr.rel (%p381) target = $region123
        $region122: #{pam_cam_layer.3} parent=114 // pred_region
          _
        $region123: #{pam_cam_layer.3} parent=114 // pred_fallthru
          _
        %s384 = sand.u32 %s167, 1
        %s385 = sand.u32 %s167, 1
        %s386 = smul.addr %s385, 16
        %s387 = scalar_lea.vmem [#allocation5], %s386
        // Predicated region
        $region124: #{pam_cam_layer.3} parent=114 // pred_check
          %p388 = pneg %p180
        $region125: #{pam_cam_layer.3} parent=114 // pred_check_branch
          %390 = sbr.rel (%p388) target = $region127
        $region126: #{pam_cam_layer.3} parent=114 // pred_region
          _
        $region127: #{pam_cam_layer.3} parent=114 // pred_fallthru
          _
        %391 = sfence
        %p392 = pneg %p46
        %p393 = pneg %p43
        %s394 = sand.u32 %s61, 1
        %s395 = sand.u32 %s61, 1
        %s396 = smul.addr %s395, 8
        %s397 = scalar_lea.vmem [#allocation4], %s396
        %p398 = pneg %p74
        %p399 = pneg %p71
        %p400 = scmp.lt.s32.totalorder %s22, 1
        %s401 = scalar_select %p400, %s22, 1
        %s402 = smul.addr %s401, 4
        %s403 = smul.addr %s402, 4
        %s404 = scalar_lea.vmem %s2, %s403
        %p405 = pneg %p100
        %p406 = pneg %p97
        %p407 = scmp.lt.s32.totalorder %s22, 1
        %s408 = scalar_select %p407, %s22, 1
        %s409 = smul.addr %s408, 4
        %s410 = smul.addr %s409, 4
        %s411 = scalar_lea.vmem %s3, %s410
        %p412 = pneg %p126
        %p413 = pneg %p123
        %p414 = scmp.lt.s32.totalorder %s22, 1
        %s415 = scalar_select %p414, %s22, 1
        %s416 = smul.addr %s415, 2
        %s417 = smul.addr %s416, 4
        %s418 = scalar_lea.vmem %s4, %s417
        %p419 = pneg %p152
        %p420 = pneg %p149
        %s421 = sand.u32 %s167, 1
        %s422 = sand.u32 %s167, 1
        %s423 = smul.addr %s422, 16
        %s424 = scalar_lea.vmem [#allocation5], %s423
        %p425 = pneg %p180
        %p426 = pneg %p177
        %p427 = pneg %p208
        %p428 = pneg %p205
        %s429 = sand.u32 %s195, 1
        %s430 = sand.u32 %s195, 1
        %s431 = smul.addr %s430, 16
        %s432 = scalar_lea.vmem [#allocation6], %s431
        %p433 = scmp.lt.s32.totalorder %s22, 1
        %s434 = scalar_select %p433, %s22, 1
        %s435 = smul.addr %s434, 4
        %s436 = smul.addr %s435, 4
        %s437 = scalar_lea.vmem %s2, %s436
        %p438 = scmp.lt.s32.totalorder %s22, 1
        %s439 = scalar_select %p438, %s22, 1
        %s440 = smul.addr %s439, 4
        %s441 = smul.addr %s440, 4
        %s442 = scalar_lea.vmem %s3, %s441
        %p443 = scmp.lt.s32.totalorder %s22, 1
        %s444 = scalar_select %p443, %s22, 1
        %s445 = smul.addr %s444, 2
        %s446 = smul.addr %s445, 4
        %s447 = scalar_lea.vmem %s4, %s446
        %v449 = vld [vmem:[%s437] sm:$0xff]
        %v450 = vld [vmem:[%s437 + $0x8] sm:$0xff]
        %v451 = vld [vmem:[%s380] sm:$0xf]
        %v452 = vld [vmem:[%s380 + $0x4] sm:$0xf]
        %v455 = vunpack.c.l.b16 %v449
        %v456 = vunpack.c.h.b16 %v449
        %v457 = vunpack.c.l.b16 %v450
        %v458 = vunpack.c.h.b16 %v450
        %v459 = vpack.c.b16 %v457, %v455
        %v460 = vpack.c.b16 %v458, %v456
        %463 = vxpose.xlu0.c.b16.start [1/8] %v459, 128
        %464 = vxpose.xlu0.c.b16.cont [2/8] 0, 128
        %465 = vxpose.xlu0.c.b16.cont [3/8] 0, 128
        %466 = vxpose.xlu0.c.b16.cont [4/8] 0, 128
        %467 = vxpose.xlu0.c.b16.cont [5/8] 0, 128
        %468 = vxpose.xlu0.c.b16.cont [6/8] 0, 128
        %469 = vxpose.xlu0.c.b16.cont [7/8] 0, 128
        %470 = vxpose.xlu0.c.b16.end [8/8] 0, 128
        %v471 = vpop.trf.xlu0
        %v472 = vpop.trf.xlu0
        %v473 = vpop.trf.xlu0
        %v474 = vpop.trf.xlu0
        %v475 = vpop.trf.xlu0
        %v476 = vpop.trf.xlu0
        %v477 = vpop.trf.xlu0
        %v478 = vpop.trf.xlu0
        %479 = vxpose.xlu0.c.b16.start [1/8] %v460, 128
        %480 = vxpose.xlu0.c.b16.cont [2/8] 0, 128
        %481 = vxpose.xlu0.c.b16.cont [3/8] 0, 128
        %482 = vxpose.xlu0.c.b16.cont [4/8] 0, 128
        %483 = vxpose.xlu0.c.b16.cont [5/8] 0, 128
        %484 = vxpose.xlu0.c.b16.cont [6/8] 0, 128
        %485 = vxpose.xlu0.c.b16.cont [7/8] 0, 128
        %486 = vxpose.xlu0.c.b16.end [8/8] 0, 128
        %v487 = vpop.trf.xlu0
        %v488 = vpop.trf.xlu0
        %v489 = vpop.trf.xlu0
        %v490 = vpop.trf.xlu0
        %v491 = vpop.trf.xlu0
        %v492 = vpop.trf.xlu0
        %v493 = vpop.trf.xlu0
        %v494 = vpop.trf.xlu0
        %v497 = vunpack.c.l.b16 %v451
        %v498 = vunpack.c.l.b16 %v452
        %v499 = vpack.c.b16 %v498, %v497
        %vm501 = vcmask 130048
        %v503 = vsel %vm501, %v471, 0
        %v506 = vsel %vm501, %v472, 0
        %v509 = vsel %vm501, %v473, 0
        %v512 = vsel %vm501, %v474, 0
        %v515 = vsel %vm501, %v475, 0
        %v518 = vsel %vm501, %v476, 0
        %v521 = vsel %vm501, %v477, 0
        %v524 = vsel %vm501, %v478, 0
        %v527 = vsel %vm501, %v487, 0
        %v530 = vsel %vm501, %v488, 0
        %v533 = vsel %vm501, %v489, 0
        %v536 = vsel %vm501, %v490, 0
        %v539 = vsel %vm501, %v491, 0
        %v542 = vsel %vm501, %v492, 0
        %v545 = vsel %vm501, %v493, 0
        %v548 = vsel %vm501, %v494, 0
        %550 = vmatprep.subr.bf16.mxu0 0
        %551 = vmatpush1.bf16.msra.mxu0 0
        %552 = vmatprep.subr.bf16.mxu0 0
        %553 = vmatpush1.bf16.msra.mxu0 0
        %554 = vmatprep.subr.bf16.mxu0 0
        %555 = vmatpush1.bf16.msra.mxu0 0
        %556 = vmatprep.subr.bf16.mxu0 0
        %557 = vmatpush1.bf16.msra.mxu0 0
        %558 = vmatprep.subr.bf16.mxu0 0
        %559 = vmatpush1.bf16.msra.mxu0 0
        %560 = vmatprep.subr.bf16.mxu0 0
        %561 = vmatpush1.bf16.msra.mxu0 0
        %562 = vmatprep.subr.bf16.mxu0 0
        %563 = vmatpush1.bf16.msra.mxu0 0
        %564 = vmatprep.subr.bf16.mxu0 0
        %565 = vmatpush1.bf16.msra.mxu0 %v499
        %566 = vmatprep.subr.bf16.mxu0 0
        %567 = vmatpush2.bf16.msra.mxu0 0
        %568 = vmatprep.subr.bf16.mxu0 0
        %569 = vmatpush2.bf16.msra.mxu0 0
        %570 = vmatprep.subr.bf16.mxu0 0
        %571 = vmatpush2.bf16.msra.mxu0 0
        %572 = vmatprep.subr.bf16.mxu0 0
        %573 = vmatpush2.bf16.msra.mxu0 0
        %574 = vmatprep.subr.bf16.mxu0 0
        %575 = vmatpush2.bf16.msra.mxu0 0
        %576 = vmatprep.subr.bf16.mxu0 0
        %577 = vmatpush2.bf16.msra.mxu0 0
        %578 = vmatprep.subr.bf16.mxu0 0
        %579 = vmatpush2.bf16.msra.mxu0 0
        %580 = vmatprep.subr.bf16.mxu0 0
        %581 = vmatpush2.bf16.msra.mxu0 0
        %582 = vmatprep.mubr.bf16.mxu0 0
        %583 = vmatmul.mubr.bf16.gmra.mxu0 %v503
        %v584 = vpop.f32.mrf.mxu0
        %v585 = vadd.f32 0.0, %v584
        %v586 = vpop.f32.mrf.mxu0
        %v587 = vpop.f32.mrf.mxu0
        %v588 = vadd.f32 0.0, %v587
        %v589 = vpop.f32.mrf.mxu0
        %590 = vmatprep.mubr.bf16.mxu0 0
        %591 = vmatmul.mubr.bf16.gmra.mxu0 %v506
        %v592 = vpop.f32.mrf.mxu0
        %v593 = vadd.f32 0.0, %v592
        %v594 = vpop.f32.mrf.mxu0
        %v595 = vpop.f32.mrf.mxu0
        %v596 = vadd.f32 0.0, %v595
        %v597 = vpop.f32.mrf.mxu0
        %598 = vmatprep.mubr.bf16.mxu0 0
        %599 = vmatmul.mubr.bf16.gmra.mxu0 %v509
        %v600 = vpop.f32.mrf.mxu0
        %v601 = vadd.f32 0.0, %v600
        %v602 = vpop.f32.mrf.mxu0
        %v603 = vpop.f32.mrf.mxu0
        %v604 = vadd.f32 0.0, %v603
        %v605 = vpop.f32.mrf.mxu0
        %606 = vmatprep.mubr.bf16.mxu0 0
        %607 = vmatmul.mubr.bf16.gmra.mxu0 %v512
        %v608 = vpop.f32.mrf.mxu0
        %v609 = vadd.f32 0.0, %v608
        %v610 = vpop.f32.mrf.mxu0
        %v611 = vpop.f32.mrf.mxu0
        %v612 = vadd.f32 0.0, %v611
        %v613 = vpop.f32.mrf.mxu0
        %614 = vmatprep.mubr.bf16.mxu0 0
        %615 = vmatmul.mubr.bf16.gmra.mxu0 %v515
        %v616 = vpop.f32.mrf.mxu0
        %v617 = vadd.f32 0.0, %v616
        %v618 = vpop.f32.mrf.mxu0
        %v619 = vpop.f32.mrf.mxu0
        %v620 = vadd.f32 0.0, %v619
        %v621 = vpop.f32.mrf.mxu0
        %622 = vmatprep.mubr.bf16.mxu0 0
        %623 = vmatmul.mubr.bf16.gmra.mxu0 %v518
        %v624 = vpop.f32.mrf.mxu0
        %v625 = vadd.f32 0.0, %v624
        %v626 = vpop.f32.mrf.mxu0
        %v627 = vpop.f32.mrf.mxu0
        %v628 = vadd.f32 0.0, %v627
        %v629 = vpop.f32.mrf.mxu0
        %630 = vmatprep.mubr.bf16.mxu0 0
        %631 = vmatmul.mubr.bf16.gmra.mxu0 %v521
        %v632 = vpop.f32.mrf.mxu0
        %v633 = vadd.f32 0.0, %v632
        %v634 = vpop.f32.mrf.mxu0
        %v635 = vpop.f32.mrf.mxu0
        %v636 = vadd.f32 0.0, %v635
        %v637 = vpop.f32.mrf.mxu0
        %638 = vmatprep.mubr.bf16.mxu0 0
        %639 = vmatmul.mubr.bf16.gmra.mxu0 %v524
        %v640 = vpop.f32.mrf.mxu0
        %v641 = vadd.f32 0.0, %v640
        %v642 = vpop.f32.mrf.mxu0
        %v643 = vpop.f32.mrf.mxu0
        %v644 = vadd.f32 0.0, %v643
        %v645 = vpop.f32.mrf.mxu0
        %646 = vmatprep.mubr.bf16.mxu0 0
        %647 = vmatmul.mubr.bf16.gmra.mxu0 %v527
        %v648 = vpop.f32.mrf.mxu0
        %v649 = vadd.f32 0.0, %v648
        %v650 = vpop.f32.mrf.mxu0
        %v651 = vpop.f32.mrf.mxu0
        %v652 = vadd.f32 0.0, %v651
        %v653 = vpop.f32.mrf.mxu0
        %654 = vmatprep.mubr.bf16.mxu0 0
        %655 = vmatmul.mubr.bf16.gmra.mxu0 %v530
        %v656 = vpop.f32.mrf.mxu0
        %v657 = vadd.f32 0.0, %v656
        %v658 = vpop.f32.mrf.mxu0
        %v659 = vpop.f32.mrf.mxu0
        %v660 = vadd.f32 0.0, %v659
        %v661 = vpop.f32.mrf.mxu0
        %662 = vmatprep.mubr.bf16.mxu0 0
        %663 = vmatmul.mubr.bf16.gmra.mxu0 %v533
        %v664 = vpop.f32.mrf.mxu0
        %v665 = vadd.f32 0.0, %v664
        %v666 = vpop.f32.mrf.mxu0
        %v667 = vpop.f32.mrf.mxu0
        %v668 = vadd.f32 0.0, %v667
        %v669 = vpop.f32.mrf.mxu0
        %670 = vmatprep.mubr.bf16.mxu0 0
        %671 = vmatmul.mubr.bf16.gmra.mxu0 %v536
        %v672 = vpop.f32.mrf.mxu0
        %v673 = vadd.f32 0.0, %v672
        %v674 = vpop.f32.mrf.mxu0
        %v675 = vpop.f32.mrf.mxu0
        %v676 = vadd.f32 0.0, %v675
        %v677 = vpop.f32.mrf.mxu0
        %678 = vmatprep.mubr.bf16.mxu0 0
        %679 = vmatmul.mubr.bf16.gmra.mxu0 %v539
        %v680 = vpop.f32.mrf.mxu0
        %v681 = vadd.f32 0.0, %v680
        %v682 = vpop.f32.mrf.mxu0
        %v683 = vpop.f32.mrf.mxu0
        %v684 = vadd.f32 0.0, %v683
        %v685 = vpop.f32.mrf.mxu0
        %686 = vmatprep.mubr.bf16.mxu0 0
        %687 = vmatmul.mubr.bf16.gmra.mxu0 %v542
        %v688 = vpop.f32.mrf.mxu0
        %v689 = vadd.f32 0.0, %v688
        %v690 = vpop.f32.mrf.mxu0
        %v691 = vpop.f32.mrf.mxu0
        %v692 = vadd.f32 0.0, %v691
        %v693 = vpop.f32.mrf.mxu0
        %694 = vmatprep.mubr.bf16.mxu0 0
        %695 = vmatmul.mubr.bf16.gmra.mxu0 %v545
        %v696 = vpop.f32.mrf.mxu0
        %v697 = vadd.f32 0.0, %v696
        %v698 = vpop.f32.mrf.mxu0
        %v699 = vpop.f32.mrf.mxu0
        %v700 = vadd.f32 0.0, %v699
        %v701 = vpop.f32.mrf.mxu0
        %702 = vmatprep.mubr.bf16.mxu0 0
        %703 = vmatmul.mubr.bf16.gmra.mxu0 %v548
        %v704 = vpop.f32.mrf.mxu0
        %v705 = vadd.f32 0.0, %v704
        %v706 = vpop.f32.mrf.mxu0
        %v707 = vpop.f32.mrf.mxu0
        %v708 = vadd.f32 0.0, %v707
        %v709 = vpop.f32.mrf.mxu0
        %710 = vdwg.mxu0
        %v711 = vmax.f32 %v585, %v601
        %v712 = vmax.f32 %v588, %v604
        %v713 = vmax.f32 %v593, %v609
        %v714 = vmax.f32 %v596, %v612
        %v715 = vmax.f32 %v711, %v617
        %v716 = vmax.f32 %v712, %v620
        %v717 = vmax.f32 %v713, %v625
        %v718 = vmax.f32 %v714, %v628
        %v719 = vmax.f32 %v715, %v633
        %v720 = vmax.f32 %v716, %v636
        %v721 = vmax.f32 %v717, %v641
        %v722 = vmax.f32 %v718, %v644
        %v723 = vmax.f32 %v719, %v649
        %v724 = vmax.f32 %v720, %v652
        %v725 = vmax.f32 %v721, %v657
        %v726 = vmax.f32 %v722, %v660
        %v727 = vmax.f32 %v723, %v665
        %v728 = vmax.f32 %v724, %v668
        %v729 = vmax.f32 %v725, %v673
        %v730 = vmax.f32 %v726, %v676
        %v731 = vmax.f32 %v727, %v681
        %v732 = vmax.f32 %v728, %v684
        %v733 = vmax.f32 %v729, %v689
        %v734 = vmax.f32 %v730, %v692
        %v735 = vmax.f32 %v731, %v697
        %v736 = vmax.f32 %v732, %v700
        %v737 = vmax.f32 %v733, %v705
        %v738 = vmax.f32 %v734, %v708
        %v739 = vmax.f32 %v735, %v736
        %v740 = vmax.f32 %v737, %v738
        %v741 = vmax.f32 %v739, %v740
        %v742 = vrot.slane %v741, 4
        %v743 = vmax.f32 %v741, %v742
        %v744 = vrot.slane %v743, 2
        %v745 = vmax.f32 %v743, %v744
        %v746 = vrot.slane %v745, 1
        %v747 = vmax.f32 %v745, %v746
        %v748 = vsub.f32 %v585, %v747
        %v749 = vsub.f32 %v588, %v747
        %v750 = vsub.f32 %v593, %v747
        %v751 = vsub.f32 %v596, %v747
        %v752 = vsub.f32 %v601, %v747
        %v753 = vsub.f32 %v604, %v747
        %v754 = vsub.f32 %v609, %v747
        %v755 = vsub.f32 %v612, %v747
        %v756 = vsub.f32 %v617, %v747
        %v757 = vsub.f32 %v620, %v747
        %v758 = vsub.f32 %v625, %v747
        %v759 = vsub.f32 %v628, %v747
        %v760 = vsub.f32 %v633, %v747
        %v761 = vsub.f32 %v636, %v747
        %v762 = vsub.f32 %v641, %v747
        %v763 = vsub.f32 %v644, %v747
        %v764 = vsub.f32 %v649, %v747
        %v765 = vsub.f32 %v652, %v747
        %v766 = vsub.f32 %v657, %v747
        %v767 = vsub.f32 %v660, %v747
        %v768 = vsub.f32 %v665, %v747
        %v769 = vsub.f32 %v668, %v747
        %v770 = vsub.f32 %v673, %v747
        %v771 = vsub.f32 %v676, %v747
        %v772 = vsub.f32 %v681, %v747
        %v773 = vsub.f32 %v684, %v747
        %v774 = vsub.f32 %v689, %v747
        %v775 = vsub.f32 %v692, %v747
        %v776 = vsub.f32 %v697, %v747
        %v777 = vsub.f32 %v700, %v747
        %v778 = vsub.f32 %v705, %v747
        %v779 = vsub.f32 %v708, %v747
        %v780 = vmul.f32 %v748, 1.442695
        %v781 = vpow.pop %v780
        %v782 = vmul.f32 %v749, 1.442695
        %v783 = vpow.pop %v782
        %v784 = vmul.f32 %v750, 1.442695
        %v785 = vpow.pop %v784
        %v786 = vmul.f32 %v751, 1.442695
        %v787 = vpow.pop %v786
        %v788 = vmul.f32 %v752, 1.442695
        %v789 = vpow.pop %v788
        %v790 = vmul.f32 %v753, 1.442695
        %v791 = vpow.pop %v790
        %v792 = vmul.f32 %v754, 1.442695
        %v793 = vpow.pop %v792
        %v794 = vmul.f32 %v755, 1.442695
        %v795 = vpow.pop %v794
        %v796 = vmul.f32 %v756, 1.442695
        %v797 = vpow.pop %v796
        %v798 = vmul.f32 %v757, 1.442695
        %v799 = vpow.pop %v798
        %v800 = vmul.f32 %v758, 1.442695
        %v801 = vpow.pop %v800
        %v802 = vmul.f32 %v759, 1.442695
        %v803 = vpow.pop %v802
        %v804 = vmul.f32 %v760, 1.442695
        %v805 = vpow.pop %v804
        %v806 = vmul.f32 %v761, 1.442695
        %v807 = vpow.pop %v806
        %v808 = vmul.f32 %v762, 1.442695
        %v809 = vpow.pop %v808
        %v810 = vmul.f32 %v763, 1.442695
        %v811 = vpow.pop %v810
        %v812 = vmul.f32 %v764, 1.442695
        %v813 = vpow.pop %v812
        %v814 = vmul.f32 %v765, 1.442695
        %v815 = vpow.pop %v814
        %v816 = vmul.f32 %v766, 1.442695
        %v817 = vpow.pop %v816
        %v818 = vmul.f32 %v767, 1.442695
        %v819 = vpow.pop %v818
        %v820 = vmul.f32 %v768, 1.442695
        %v821 = vpow.pop %v820
        %v822 = vmul.f32 %v769, 1.442695
        %v823 = vpow.pop %v822
        %v824 = vmul.f32 %v770, 1.442695
        %v825 = vpow.pop %v824
        %v826 = vmul.f32 %v771, 1.442695
        %v827 = vpow.pop %v826
        %v828 = vmul.f32 %v772, 1.442695
        %v829 = vpow.pop %v828
        %v830 = vmul.f32 %v773, 1.442695
        %v831 = vpow.pop %v830
        %v832 = vmul.f32 %v774, 1.442695
        %v833 = vpow.pop %v832
        %v834 = vmul.f32 %v775, 1.442695
        %v835 = vpow.pop %v834
        %v836 = vmul.f32 %v776, 1.442695
        %v837 = vpow.pop %v836
        %v838 = vmul.f32 %v777, 1.442695
        %v839 = vpow.pop %v838
        %v840 = vmul.f32 %v778, 1.442695
        %v841 = vpow.pop %v840
        %v842 = vmul.f32 %v779, 1.442695
        %v843 = vpow.pop %v842
        %v844 = vadd.f32 %v781, %v783
        %v845 = vadd.f32 %v844, %v785
        %v846 = vadd.f32 %v845, %v787
        %v847 = vadd.f32 %v846, %v789
        %v848 = vadd.f32 %v847, %v791
        %v849 = vadd.f32 %v848, %v793
        %v850 = vadd.f32 %v849, %v795
        %v851 = vadd.f32 %v850, %v797
        %v852 = vadd.f32 %v851, %v799
        %v853 = vadd.f32 %v852, %v801
        %v854 = vadd.f32 %v853, %v803
        %v855 = vadd.f32 %v854, %v805
        %v856 = vadd.f32 %v855, %v807
        %v857 = vadd.f32 %v856, %v809
        %v858 = vadd.f32 %v857, %v811
        %v859 = vadd.f32 %v858, %v813
        %v860 = vadd.f32 %v859, %v815
        %v861 = vadd.f32 %v860, %v817
        %v862 = vadd.f32 %v861, %v819
        %v863 = vadd.f32 %v862, %v821
        %v864 = vadd.f32 %v863, %v823
        %v865 = vadd.f32 %v864, %v825
        %v866 = vadd.f32 %v865, %v827
        %v867 = vadd.f32 %v866, %v829
        %v868 = vadd.f32 %v867, %v831
        %v869 = vadd.f32 %v868, %v833
        %v870 = vadd.f32 %v869, %v835
        %v871 = vadd.f32 %v870, %v837
        %v872 = vadd.f32 %v871, %v839
        %v873 = vadd.f32 %v872, %v841
        %v874 = vadd.f32 %v873, %v843
        %v875 = vrot.slane %v874, 4
        %v876 = vadd.f32 %v874, %v875
        %v877 = vrot.slane %v876, 2
        %v878 = vadd.f32 %v876, %v877
        %v879 = vrot.slane %v878, 1
        %v880 = vadd.f32 %v878, %v879
        %v881 = vld [vmem:[%s442] sm:$0xff]
        %v882 = vld [vmem:[%s442 + $0x8] sm:$0xff]
        %v883 = vpack.c.bf16 %v783, %v781
        %v884 = vpack.c.bf16 %v787, %v785
        %v885 = vpack.c.bf16 %v791, %v789
        %v886 = vpack.c.bf16 %v795, %v793
        %v887 = vpack.c.bf16 %v799, %v797
        %v888 = vpack.c.bf16 %v803, %v801
        %v889 = vpack.c.bf16 %v807, %v805
        %v890 = vpack.c.bf16 %v811, %v809
        %v891 = vpack.c.bf16 %v815, %v813
        %v892 = vpack.c.bf16 %v819, %v817
        %v893 = vpack.c.bf16 %v823, %v821
        %v894 = vpack.c.bf16 %v827, %v825
        %v895 = vpack.c.bf16 %v831, %v829
        %v896 = vpack.c.bf16 %v835, %v833
        %v897 = vpack.c.bf16 %v839, %v837
        %v898 = vpack.c.bf16 %v843, %v841
        %v901 = vunpack.c.l.b16 %v881
        %v902 = vunpack.c.h.b16 %v881
        %v903 = vunpack.c.l.b16 %v882
        %v904 = vunpack.c.h.b16 %v882
        %v905 = vpack.c.b16 %v903, %v901
        %v906 = vpack.c.b16 %v904, %v902
        %909 = vmatprep.subr.bf16.mxu0 0
        %910 = vmatpush1.bf16.msra.mxu0 %v890
        %911 = vmatprep.subr.bf16.mxu0 0
        %912 = vmatpush1.bf16.msra.mxu0 %v889
        %913 = vmatprep.subr.bf16.mxu0 0
        %914 = vmatpush1.bf16.msra.mxu0 %v888
        %915 = vmatprep.subr.bf16.mxu0 0
        %916 = vmatpush1.bf16.msra.mxu0 %v887
        %917 = vmatprep.subr.bf16.mxu0 0
        %918 = vmatpush1.bf16.msra.mxu0 %v886
        %919 = vmatprep.subr.bf16.mxu0 0
        %920 = vmatpush1.bf16.msra.mxu0 %v885
        %921 = vmatprep.subr.bf16.mxu0 0
        %922 = vmatpush1.bf16.msra.mxu0 %v884
        %923 = vmatprep.subr.bf16.mxu0 0
        %924 = vmatpush1.bf16.msra.mxu0 %v883
        %925 = vmatprep.subr.bf16.mxu0 0
        %926 = vmatpush2.bf16.msra.mxu0 %v898
        %927 = vmatprep.subr.bf16.mxu0 0
        %928 = vmatpush2.bf16.msra.mxu0 %v897
        %929 = vmatprep.subr.bf16.mxu0 0
        %930 = vmatpush2.bf16.msra.mxu0 %v896
        %931 = vmatprep.subr.bf16.mxu0 0
        %932 = vmatpush2.bf16.msra.mxu0 %v895
        %933 = vmatprep.subr.bf16.mxu0 0
        %934 = vmatpush2.bf16.msra.mxu0 %v894
        %935 = vmatprep.subr.bf16.mxu0 0
        %936 = vmatpush2.bf16.msra.mxu0 %v893
        %937 = vmatprep.subr.bf16.mxu0 0
        %938 = vmatpush2.bf16.msra.mxu0 %v892
        %939 = vmatprep.subr.bf16.mxu0 0
        %940 = vmatpush2.bf16.msra.mxu0 %v891
        %941 = vmatprep.mubr.bf16.mxu0 %v906
        %942 = vmatmul.mubr.bf16.gmra.mxu0 %v905
        %v943 = vpop.f32.mrf.mxu0
        %v944 = vadd.f32 0.0, %v943
        %v945 = vpop.f32.mrf.mxu0
        %v946 = vpop.f32.mrf.mxu0
        %v947 = vadd.f32 0.0, %v946
        %v948 = vpop.f32.mrf.mxu0
        %949 = vdwg.mxu0
        %v950 = vld [vmem:[%s387] sm:$0xff]
        %v951 = vld [vmem:[%s387 + $0x8] sm:$0xff]
        %v952 = vld [vmem:[%s447] sm:$0xf]
        %v953 = vld [vmem:[%s447 + $0x4] sm:$0xf]
        %v954 = vpack.c.bf16 %v951, %v950
        %v957 = vunpack.c.l.b16 %v952
        %v958 = vunpack.c.l.b16 %v953
        %v959 = vpack.c.b16 %v958, %v957
        %v961 = vsel %vm501, %v959, 0
        %963 = vmatprep.subr.bf16.mxu0 0
        %964 = vmatpush1.bf16.msra.mxu0 0
        %965 = vmatprep.subr.bf16.mxu0 0
        %966 = vmatpush1.bf16.msra.mxu0 0
        %967 = vmatprep.subr.bf16.mxu0 0
        %968 = vmatpush1.bf16.msra.mxu0 0
        %969 = vmatprep.subr.bf16.mxu0 0
        %970 = vmatpush1.bf16.msra.mxu0 0
        %971 = vmatprep.subr.bf16.mxu0 0
        %972 = vmatpush1.bf16.msra.mxu0 0
        %973 = vmatprep.subr.bf16.mxu0 0
        %974 = vmatpush1.bf16.msra.mxu0 0
        %975 = vmatprep.subr.bf16.mxu0 0
        %976 = vmatpush1.bf16.msra.mxu0 0
        %977 = vmatprep.subr.bf16.mxu0 0
        %978 = vmatpush1.bf16.msra.mxu0 %v954
        %979 = vmatprep.subr.bf16.mxu0 0
        %980 = vmatpush2.bf16.msra.mxu0 0
        %981 = vmatprep.subr.bf16.mxu0 0
        %982 = vmatpush2.bf16.msra.mxu0 0
        %983 = vmatprep.subr.bf16.mxu0 0
        %984 = vmatpush2.bf16.msra.mxu0 0
        %985 = vmatprep.subr.bf16.mxu0 0
        %986 = vmatpush2.bf16.msra.mxu0 0
        %987 = vmatprep.subr.bf16.mxu0 0
        %988 = vmatpush2.bf16.msra.mxu0 0
        %989 = vmatprep.subr.bf16.mxu0 0
        %990 = vmatpush2.bf16.msra.mxu0 0
        %991 = vmatprep.subr.bf16.mxu0 0
        %992 = vmatpush2.bf16.msra.mxu0 0
        %993 = vmatprep.subr.bf16.mxu0 0
        %994 = vmatpush2.bf16.msra.mxu0 0
        %995 = vmatprep.mubr.bf16.mxu0 0
        %996 = vmatmul.mubr.bf16.gmra.mxu0 %v961
        %v997 = vpop.f32.mrf.mxu0
        %v998 = vadd.f32 0.0, %v997
        %v999 = vpop.f32.mrf.mxu0
        %v1000 = vpop.f32.mrf.mxu0
        %v1001 = vadd.f32 0.0, %v1000
        %v1002 = vpop.f32.mrf.mxu0
        %1003 = vdwg.mxu0
        %s1004 = sld [smem:[#allocation2]]
        %s1005 = sld [smem:[#allocation2 + $0x1]]
        %v1006 = vrcp.pop %v880
        %v1007 = vstv %s1004
        %v1008 = vmul.f32 %v1007, %v944
        %v1009 = vmul.f32 %v1007, %v947
        %v1010 = vmul.f32 %v1008, %v1006
        %v1011 = vmul.f32 %v1009, %v1006
        %v1012 = vstv %s1005
        %v1013 = vmul.f32 %v1012, %v998
        %v1014 = vmul.f32 %v1012, %v1001
        %v1015 = vadd.f32 %v1010, %v1013
        %v1016 = vadd.f32 %v1011, %v1014
        %v1017 = vmul.f32 %v950, 2.0
        %v1018 = vmul.f32 %v951, 2.0
        %v1019 = vadd.f32 %v1015, %v1017
        %v1020 = vadd.f32 %v1016, %v1018
        %1021 = vst [vmem:[%s432] sm:$0xff] %v1019
        %1022 = vst [vmem:[%s432 + $0x8] sm:$0xff] %v1020
        %s1023 = sand.u32 %s195, 1
        %s1024 = sand.u32 %s195, 1
        %s1025 = smul.addr %s1024, 16
        %s1026 = scalar_lea.vmem [#allocation6], %s1025
        // Predicated region
        $region128: #{pam_cam_layer.3} parent=114 // pred_check
          %p1027 = pneg %p205
        $region129: #{pam_cam_layer.3} parent=114 // pred_check_branch
          %1029 = sbr.rel (%p1027) target = $region131
        $region130: #{pam_cam_layer.3} parent=114 // pred_region
          %s1030 = smul.addr %s22, 4
          %s1031 = sadd.s32 %s23, %s1030
          %s1032 = smul.addr %s1031, 8
          %s1033 = scalar_lea.vmem %s6, %s1032
          // Predicated region
          $region132: #{pam_cam_layer.3} parent=130 // pred_check
            _
          $region133: #{pam_cam_layer.3} parent=130 // pred_check_branch
            %1035 = sbr.rel (0) target = $region135
          $region134: #{pam_cam_layer.3} parent=130 // pred_region
            // Predicated region
            $region136: #{pam_cam_layer.3} parent=134 // pred_check
              _
            $region137: #{pam_cam_layer.3} parent=134 // pred_check_branch
              %1037 = sbr.rel (0) target = $region139
            $region138: #{pam_cam_layer.3} parent=134 // pred_region
              // Predicated region
              $region151: #{pam_cam_layer.3} parent=138 // pred_check
                _
              $region152: #{pam_cam_layer.3} parent=138 // pred_check_branch
                %1055 = sbr.rel (0) target = $region154
              $region153: #{pam_cam_layer.3} parent=138 // pred_region
                loop: start=0, step=1, limit=1
                $region155: #{pam_cam_layer.3} parent=153 // loop_pre_header
                  _
                $region156: #{pam_cam_layer.3} parent=153 // loop_header
                  %s1057 = sphi 0, %s1061
                  %p1058 = scmp.ge.s32.totalorder %s1057, 1
                  %s1062 = sphi %s1026, %s1026
                  %s1063 = sphi %s1033, %s1033
                $region157: #{pam_cam_layer.3} parent=153 // loop_header_branch
                  %1060 = sbr.rel (%p1058) target = $region161
                $region158: #{pam_cam_layer.3} parent=153 // loop_body
                  %v1064 = vld [vmem:[%s1062] sm:$0xff]
                  %1065 = vst [vmem:[%s1063] sm:$0xff] %v1064
                  %v1066 = vld [vmem:[%s1062 + $0x8] sm:$0xff]
                  %1067 = vst [vmem:[%s1063 + $0x10] sm:$0xff] %v1066
                $region159: #{pam_cam_layer.3} parent=153 // loop_footer
                  %s1061 = sadd.s32 1, %s1057
                $region160: #{pam_cam_layer.3} parent=153 // loop_footer_branch
                  %1056 = sbr.rel target = $region156
                $region161: #{pam_cam_layer.3} parent=153 // loop_exit
                  _
              $region154: #{pam_cam_layer.3} parent=138 // pred_fallthru
                _
              // Predicated region
              $region162: #{pam_cam_layer.3} parent=138 // pred_check
                _
              $region163: #{pam_cam_layer.3} parent=138 // pred_check_branch
                %1069 = sbr.rel target = $region165
              $region164: #{pam_cam_layer.3} parent=138 // pred_region
                _
              $region165: #{pam_cam_layer.3} parent=138 // pred_fallthru
                _
            $region139: #{pam_cam_layer.3} parent=134 // pred_fallthru
              _
            // Predicated region
            $region140: #{pam_cam_layer.3} parent=134 // pred_check
              _
            $region141: #{pam_cam_layer.3} parent=134 // pred_check_branch
              %1039 = sbr.rel target = $region143
            $region142: #{pam_cam_layer.3} parent=134 // pred_region
              %s1041 = ssub.s32 256, 1
              loop: start=0, step=1, limit=1
              $region144: #{pam_cam_layer.3} parent=142 // loop_pre_header
                _
              $region145: #{pam_cam_layer.3} parent=142 // loop_header
                %s1043 = sphi 0, %s1047
                %p1044 = scmp.ge.s32.totalorder %s1043, 1
                %s1048 = sphi %s1026, %s1026
                %s1049 = sphi %s1033, %s1033
              $region146: #{pam_cam_layer.3} parent=142 // loop_header_branch
                %1046 = sbr.rel (%p1044) target = $region150
              $region147: #{pam_cam_layer.3} parent=142 // loop_body
                %v1050 = vld [vmem:[%s1048] sm:%s1041]
                %1051 = vst [vmem:[%s1049] sm:%s1041] %v1050
                %v1052 = vld [vmem:[%s1048 + $0x8] sm:%s1041]
                %1053 = vst [vmem:[%s1049 + $0x10] sm:%s1041] %v1052
              $region148: #{pam_cam_layer.3} parent=142 // loop_footer
                %s1047 = sadd.s32 1, %s1043
              $region149: #{pam_cam_layer.3} parent=142 // loop_footer_branch
                %1042 = sbr.rel target = $region145
              $region150: #{pam_cam_layer.3} parent=142 // loop_exit
                _
            $region143: #{pam_cam_layer.3} parent=134 // pred_fallthru
              _
          $region135: #{pam_cam_layer.3} parent=130 // pred_fallthru
            _
          %1070 = vnop
        $region131: #{pam_cam_layer.3} parent=114 // pred_fallthru
          _
      $region115: #{pam_cam_layer.3} parent=5 // pred_fallthru
        _
      %p1071 = scmp.le.s32.totalorder 2, %s13
      // Predicated region
      $region166: #{pam_cam_layer.3} parent=5 // pred_check
        %p1072 = pneg %p1071
      $region167: #{pam_cam_layer.3} parent=5 // pred_check_branch
        %1074 = sbr.rel (%p1072) target = $region169
      $region168: #{pam_cam_layer.3} parent=5 // pred_region
        %s1075 = ssub.s32 %s13, 2
        // Predicated region
        $region170: #{pam_cam_layer.3} parent=168 // pred_check
          %p1076 = pneg %p211
        $region171: #{pam_cam_layer.3} parent=168 // pred_check_branch
          %1078 = sbr.rel (%p1076) target = $region173
        $region172: #{pam_cam_layer.3} parent=168 // pred_region
          %s1079 = sand.u32 %s196, 1
          %s1080 = sand.u32 %s196, 1
          %s1081 = smul.addr %s1080, 16
          %s1082 = scalar_lea.vmem [#allocation6], %s1081
        $region173: #{pam_cam_layer.3} parent=168 // pred_fallthru
          _
      $region169: #{pam_cam_layer.3} parent=5 // pred_fallthru
        _
    $region6: #{pam_cam_layer.3} parent=1 // loop_footer
      %s17 = sadd.s32 1, %s13
    $region7: #{pam_cam_layer.3} parent=1 // loop_footer_branch
      %12 = sbr.rel target = $region3
    $region8: #{pam_cam_layer.3} parent=1 // loop_exit
      _
    %1083 = vsyncpa [#allocation3], 1
    %s1084 = scalar_lea.sflag [#allocation3], 1
    %1085 = vsyncpa %s1084, 1

// kernel: pam_cam_layer.2
$region0: #{pam_cam_layer.2}
  #allocation0 [shape = 'u32[]', space=smem, size = 0x4, offset = 0x4, fixed_abs, tag = 'smem constant byte address 0x4 - core index']
  #allocation1 [shape = 'u32[144,128]{1,0:T(1,128)}', space=vmem, size = 0x12000, scoped, tag = 'internal scratch']
  %s0 = inlined_call_operand.vmem [shape: f32[2,16,256], index: 0, kind: input, shape index: {}]
  %s1 = inlined_call_operand.vmem [shape: bf16[32,16], index: 1, kind: input, shape index: {}]
  %s2 = inlined_call_operand.vmem [shape: f32[32,1], index: 2, kind: input, shape index: {}]
  %s3 = inlined_call_operand.vmem [shape: bf16[16,16], index: 3, kind: input, shape index: {}]
  %s4 = inlined_call_operand.vmem [shape: f32[16,1], index: 4, kind: input, shape index: {}]
  %s5 = inlined_call_operand.vmem [shape: bf16[2,16,256], index: 5, kind: output, shape index: {0}]
  %s6 = inlined_call_operand.vmem [shape: bf16[2,16,256], index: 6, kind: output, shape index: {1}]
  %s7 = inlined_call_operand.vmem [shape: bf16[2,16,256], index: 7, kind: output, shape index: {2}]
  %s8 = inlined_call_operand.vmem [shape: bf16[2,16,16], index: 8, kind: output, shape index: {3}]
  %9 = xla_tuple %s5, %s6, %s7, %s8
  %s10 = sld [smem:[#allocation0]]
  $region77: #{pam_cam_layer.2} parent=0
    _
  %s12 = ssub.s32 1, %s10
  %s13 = scalar_select 0, %s12, %s10
  loop: start=0, step=1, limit=4
  $region2: #{pam_cam_layer.2} parent=0 // loop_pre_header
    _
  $region3: #{pam_cam_layer.2} parent=0 // loop_header
    %s15 = sphi 0, %s19
    %p16 = scmp.ge.s32.totalorder %s15, 4
    %s25 = sphi 0, %s27
    %s28 = sphi 0, %s25
    %s29 = sphi 0, %s28
    %s45 = sphi 0, %s29
    %s49 = sphi 0, %s49
    %s51 = sphi 0, %s49
    %s52 = sphi 0, %s51
    %s66 = sphi 0, %s52
    %s70 = sphi 0, %s70
    %s72 = sphi 0, %s70
    %s73 = sphi 0, %s72
    %s87 = sphi 0, %s73
    %s91 = sphi 0, %s91
    %s93 = sphi 0, %s91
    %s94 = sphi 0, %s93
    %s108 = sphi 0, %s94
    %s112 = sphi 0, %s112
    %s114 = sphi 0, %s112
    %s115 = sphi 0, %s114
    %s129 = sphi 0, %s115
    %s135 = sphi 0, %s137
    %s138 = sphi 0, %s135
    %s139 = sphi 0, %s138
    %s155 = sphi 0, %s139
    %s161 = sphi 0, %s163
    %s164 = sphi 0, %s161
    %s165 = sphi 0, %s164
    %s181 = sphi 0, %s165
    %s187 = sphi 0, %s189
    %s190 = sphi 0, %s187
    %s191 = sphi 0, %s190
    %s207 = sphi 0, %s191
    %s213 = sphi 0, %s215
    %s216 = sphi 0, %s213
    %s217 = sphi 0, %s216
    %s233 = sphi 0, %s217
  $region4: #{pam_cam_layer.2} parent=0 // loop_header_branch
    %18 = sbr.rel (%p16) target = $region8
  $region5: #{pam_cam_layer.2} parent=0 // loop_body
    %s20 = ssub.s32 %s15, 1
    %s21 = ssub.s32 %s15, 2
    %s22 = sadd.s32 %s15, 1
    %s23 = ssub.s32 %s15, %s22
    %p24 = scmp.eq.s32.totalorder %s23, 0
    %s26 = sadd.s32 %s25, 1
    %s27 = scalar_select %p24, %s25, %s26
    %p30 = pneg %p24
    %p31 = scmp.eq.s32.totalorder %s15, 1
    %p32 = por %p30, %p31
    %p33 = scmp.ne.s32.totalorder %s25, %s28
    %p34 = scmp.eq.s32.totalorder %s15, 0
    %p35 = por %p33, %p34
    %p36 = scmp.ne.s32.totalorder %s25, %s28
    %p37 = scmp.eq.s32.totalorder %s20, 1
    %p38 = por %p36, %p37
    %p39 = scmp.ne.s32.totalorder %s28, %s29
    %p40 = scmp.eq.s32.totalorder %s20, 0
    %p41 = por %p39, %p40
    %p42 = scmp.ne.s32.totalorder %s28, %s29
    %p43 = scmp.eq.s32.totalorder %s21, 1
    %p44 = por %p42, %p43
    %p46 = scmp.ne.s32.totalorder %s29, %s45
    %p47 = scmp.eq.s32.totalorder %s21, 0
    %p48 = por %p46, %p47
    %s50 = sadd.s32 %s49, 1
    %p53 = scmp.eq.s32.totalorder %s15, 1
    %p54 = scmp.ne.s32.totalorder %s49, %s51
    %p55 = scmp.eq.s32.totalorder %s15, 0
    %p56 = por %p54, %p55
    %p57 = scmp.ne.s32.totalorder %s49, %s51
    %p58 = scmp.eq.s32.totalorder %s20, 1
    %p59 = por %p57, %p58
    %p60 = scmp.ne.s32.totalorder %s51, %s52
    %p61 = scmp.eq.s32.totalorder %s20, 0
    %p62 = por %p60, %p61
    %p63 = scmp.ne.s32.totalorder %s51, %s52
    %p64 = scmp.eq.s32.totalorder %s21, 1
    %p65 = por %p63, %p64
    %p67 = scmp.ne.s32.totalorder %s52, %s66
    %p68 = scmp.eq.s32.totalorder %s21, 0
    %p69 = por %p67, %p68
    %s71 = sadd.s32 %s70, 1
    %p74 = scmp.eq.s32.totalorder %s15, 1
    %p75 = scmp.ne.s32.totalorder %s70, %s72
    %p76 = scmp.eq.s32.totalorder %s15, 0
    %p77 = por %p75, %p76
    %p78 = scmp.ne.s32.totalorder %s70, %s72
    %p79 = scmp.eq.s32.totalorder %s20, 1
    %p80 = por %p78, %p79
    %p81 = scmp.ne.s32.totalorder %s72, %s73
    %p82 = scmp.eq.s32.totalorder %s20, 0
    %p83 = por %p81, %p82
    %p84 = scmp.ne.s32.totalorder %s72, %s73
    %p85 = scmp.eq.s32.totalorder %s21, 1
    %p86 = por %p84, %p85
    %p88 = scmp.ne.s32.totalorder %s73, %s87
    %p89 = scmp.eq.s32.totalorder %s21, 0
    %p90 = por %p88, %p89
    %s92 = sadd.s32 %s91, 1
    %p95 = scmp.eq.s32.totalorder %s15, 1
    %p96 = scmp.ne.s32.totalorder %s91, %s93
    %p97 = scmp.eq.s32.totalorder %s15, 0
    %p98 = por %p96, %p97
    %p99 = scmp.ne.s32.totalorder %s91, %s93
    %p100 = scmp.eq.s32.totalorder %s20, 1
    %p101 = por %p99, %p100
    %p102 = scmp.ne.s32.totalorder %s93, %s94
    %p103 = scmp.eq.s32.totalorder %s20, 0
    %p104 = por %p102, %p103
    %p105 = scmp.ne.s32.totalorder %s93, %s94
    %p106 = scmp.eq.s32.totalorder %s21, 1
    %p107 = por %p105, %p106
    %p109 = scmp.ne.s32.totalorder %s94, %s108
    %p110 = scmp.eq.s32.totalorder %s21, 0
    %p111 = por %p109, %p110
    %s113 = sadd.s32 %s112, 1
    %p116 = scmp.eq.s32.totalorder %s15, 1
    %p117 = scmp.ne.s32.totalorder %s112, %s114
    %p118 = scmp.eq.s32.totalorder %s15, 0
    %p119 = por %p117, %p118
    %p120 = scmp.ne.s32.totalorder %s112, %s114
    %p121 = scmp.eq.s32.totalorder %s20, 1
    %p122 = por %p120, %p121
    %p123 = scmp.ne.s32.totalorder %s114, %s115
    %p124 = scmp.eq.s32.totalorder %s20, 0
    %p125 = por %p123, %p124
    %p126 = scmp.ne.s32.totalorder %s114, %s115
    %p127 = scmp.eq.s32.totalorder %s21, 1
    %p128 = por %p126, %p127
    %p130 = scmp.ne.s32.totalorder %s115, %s129
    %p131 = scmp.eq.s32.totalorder %s21, 0
    %p132 = por %p130, %p131
    %s133 = ssub.s32 %s15, %s22
    %p134 = scmp.eq.s32.totalorder %s133, 0
    %s136 = sadd.s32 %s135, 1
    %s137 = scalar_select %p134, %s135, %s136
    %p140 = pneg %p134
    %p141 = scmp.eq.s32.totalorder %s15, 1
    %p142 = por %p140, %p141
    %p143 = scmp.ne.s32.totalorder %s135, %s138
    %p144 = scmp.eq.s32.totalorder %s15, 0
    %p145 = por %p143, %p144
    %p146 = scmp.ne.s32.totalorder %s135, %s138
    %p147 = scmp.eq.s32.totalorder %s20, 1
    %p148 = por %p146, %p147
    %p149 = scmp.ne.s32.totalorder %s138, %s139
    %p150 = scmp.eq.s32.totalorder %s20, 0
    %p151 = por %p149, %p150
    %p152 = scmp.ne.s32.totalorder %s138, %s139
    %p153 = scmp.eq.s32.totalorder %s21, 1
    %p154 = por %p152, %p153
    %p156 = scmp.ne.s32.totalorder %s139, %s155
    %p157 = scmp.eq.s32.totalorder %s21, 0
    %p158 = por %p156, %p157
    %s159 = ssub.s32 %s15, %s22
    %p160 = scmp.eq.s32.totalorder %s159, 0
    %s162 = sadd.s32 %s161, 1
    %s163 = scalar_select %p160, %s161, %s162
    %p166 = pneg %p160
    %p167 = scmp.eq.s32.totalorder %s15, 1
    %p168 = por %p166, %p167
    %p169 = scmp.ne.s32.totalorder %s161, %s164
    %p170 = scmp.eq.s32.totalorder %s15, 0
    %p171 = por %p169, %p170
    %p172 = scmp.ne.s32.totalorder %s161, %s164
    %p173 = scmp.eq.s32.totalorder %s20, 1
    %p174 = por %p172, %p173
    %p175 = scmp.ne.s32.totalorder %s164, %s165
    %p176 = scmp.eq.s32.totalorder %s20, 0
    %p177 = por %p175, %p176
    %p178 = scmp.ne.s32.totalorder %s164, %s165
    %p179 = scmp.eq.s32.totalorder %s21, 1
    %p180 = por %p178, %p179
    %p182 = scmp.ne.s32.totalorder %s165, %s181
    %p183 = scmp.eq.s32.totalorder %s21, 0
    %p184 = por %p182, %p183
    %s185 = ssub.s32 %s15, %s22
    %p186 = scmp.eq.s32.totalorder %s185, 0
    %s188 = sadd.s32 %s187, 1
    %s189 = scalar_select %p186, %s187, %s188
    %p192 = pneg %p186
    %p193 = scmp.eq.s32.totalorder %s15, 1
    %p194 = por %p192, %p193
    %p195 = scmp.ne.s32.totalorder %s187, %s190
    %p196 = scmp.eq.s32.totalorder %s15, 0
    %p197 = por %p195, %p196
    %p198 = scmp.ne.s32.totalorder %s187, %s190
    %p199 = scmp.eq.s32.totalorder %s20, 1
    %p200 = por %p198, %p199
    %p201 = scmp.ne.s32.totalorder %s190, %s191
    %p202 = scmp.eq.s32.totalorder %s20, 0
    %p203 = por %p201, %p202
    %p204 = scmp.ne.s32.totalorder %s190, %s191
    %p205 = scmp.eq.s32.totalorder %s21, 1
    %p206 = por %p204, %p205
    %p208 = scmp.ne.s32.totalorder %s191, %s207
    %p209 = scmp.eq.s32.totalorder %s21, 0
    %p210 = por %p208, %p209
    %s211 = ssub.s32 %s15, %s22
    %p212 = scmp.eq.s32.totalorder %s211, 0
    %s214 = sadd.s32 %s213, 1
    %s215 = scalar_select %p212, %s213, %s214
    %p218 = pneg %p212
    %p219 = scmp.eq.s32.totalorder %s15, 1
    %p220 = por %p218, %p219
    %p221 = scmp.ne.s32.totalorder %s213, %s216
    %p222 = scmp.eq.s32.totalorder %s15, 0
    %p223 = por %p221, %p222
    %p224 = scmp.ne.s32.totalorder %s213, %s216
    %p225 = scmp.eq.s32.totalorder %s20, 1
    %p226 = por %p224, %p225
    %p227 = scmp.ne.s32.totalorder %s216, %s217
    %p228 = scmp.eq.s32.totalorder %s20, 0
    %p229 = por %p227, %p228
    %p230 = scmp.ne.s32.totalorder %s216, %s217
    %p231 = scmp.eq.s32.totalorder %s21, 1
    %p232 = por %p230, %p231
    %p234 = scmp.ne.s32.totalorder %s217, %s233
    %p235 = scmp.eq.s32.totalorder %s21, 0
    %p236 = por %p234, %p235
    %p237 = scmp.le.s32.totalorder 1, %s15
    %p238 = scmp.lt.s32.totalorder %s15, 3
    %p239 = pnand %p237, %p238
    %p240 = pneg %p239
    // Predicated region
    $region9: #{pam_cam_layer.2} parent=5 // pred_check
      _
    $region10: #{pam_cam_layer.2} parent=5 // pred_check_branch
      %242 = sbr.rel (%p239) target = $region12
    $region11: #{pam_cam_layer.2} parent=5 // pred_region
      %s243 = ssub.s32 %s15, 1
      // Predicated region
      $region13: #{pam_cam_layer.2} parent=11 // pred_check
        %p244 = pneg %p62
      $region14: #{pam_cam_layer.2} parent=11 // pred_check_branch
        %246 = sbr.rel (%p244) target = $region16
      $region15: #{pam_cam_layer.2} parent=11 // pred_region
        _
      $region16: #{pam_cam_layer.2} parent=11 // pred_fallthru
        _
      // Predicated region
      $region17: #{pam_cam_layer.2} parent=11 // pred_check
        %p247 = pneg %p83
      $region18: #{pam_cam_layer.2} parent=11 // pred_check_branch
        %249 = sbr.rel (%p247) target = $region20
      $region19: #{pam_cam_layer.2} parent=11 // pred_region
        _
      $region20: #{pam_cam_layer.2} parent=11 // pred_fallthru
        _
      // Predicated region
      $region21: #{pam_cam_layer.2} parent=11 // pred_check
        %p250 = pneg %p104
      $region22: #{pam_cam_layer.2} parent=11 // pred_check_branch
        %252 = sbr.rel (%p250) target = $region24
      $region23: #{pam_cam_layer.2} parent=11 // pred_region
        _
      $region24: #{pam_cam_layer.2} parent=11 // pred_fallthru
        _
      // Predicated region
      $region25: #{pam_cam_layer.2} parent=11 // pred_check
        %p253 = pneg %p125
      $region26: #{pam_cam_layer.2} parent=11 // pred_check_branch
        %255 = sbr.rel (%p253) target = $region28
      $region27: #{pam_cam_layer.2} parent=11 // pred_region
        _
      $region28: #{pam_cam_layer.2} parent=11 // pred_fallthru
        _
    $region12: #{pam_cam_layer.2} parent=5 // pred_fallthru
      _
    %p256 = scmp.lt.s32.totalorder %s15, 2
    // Predicated region
    $region29: #{pam_cam_layer.2} parent=5 // pred_check
      %p257 = pneg %p256
    $region30: #{pam_cam_layer.2} parent=5 // pred_check_branch
      %259 = sbr.rel (%p257) target = $region32
    $region31: #{pam_cam_layer.2} parent=5 // pred_region
      // Predicated region
      $region33: #{pam_cam_layer.2} parent=31 // pred_check
        %p260 = pneg %p35
      $region34: #{pam_cam_layer.2} parent=31 // pred_check_branch
        %262 = sbr.rel (%p260) target = $region36
      $region35: #{pam_cam_layer.2} parent=31 // pred_region
        %p263 = scmp.lt.s32.totalorder %s15, 1
        %s264 = scalar_select %p263, %s15, 1
        %s265 = smul.addr %s264, 4
        %s266 = smul.addr %s265, 8
        %s267 = scalar_lea.vmem %s0, %s266
      $region36: #{pam_cam_layer.2} parent=31 // pred_fallthru
        _
    $region32: #{pam_cam_layer.2} parent=5 // pred_fallthru
      _
    %p268 = scmp.le.s32.totalorder 1, %s15
    %p269 = scmp.lt.s32.totalorder %s15, 3
    %p270 = pnand %p268, %p269
    %p271 = pneg %p270
    // Predicated region
    $region37: #{pam_cam_layer.2} parent=5 // pred_check
      _
    $region38: #{pam_cam_layer.2} parent=5 // pred_check_branch
      %273 = sbr.rel (%p270) target = $region40
    $region39: #{pam_cam_layer.2} parent=5 // pred_region
      %s274 = ssub.s32 %s15, 1
      %p275 = scmp.lt.s32.totalorder %s20, 1
      %s276 = scalar_select %p275, %s20, 1
      %s277 = smul.addr %s276, 4
      %s278 = smul.addr %s277, 8
      %s279 = scalar_lea.vmem %s0, %s278
      %p280 = pneg %p41
      %p281 = pneg %p38
      %p282 = pneg %p62
      %p283 = pneg %p59
      %p284 = pneg %p83
      %p285 = pneg %p80
      %p286 = pneg %p104
      %p287 = pneg %p101
      %p288 = pneg %p125
      %p289 = pneg %p122
      %p290 = pneg %p151
      %p291 = pneg %p148
      %p292 = scmp.lt.s32.totalorder %s20, 1
      %s293 = scalar_select %p292, %s20, 1
      %s294 = smul.addr %s293, 4
      %s295 = smul.addr %s294, 4
      %s296 = scalar_lea.vmem %s5, %s295
      %p297 = pneg %p177
      %p298 = pneg %p174
      %p299 = scmp.lt.s32.totalorder %s20, 1
      %s300 = scalar_select %p299, %s20, 1
      %s301 = smul.addr %s300, 4
      %s302 = smul.addr %s301, 4
      %s303 = scalar_lea.vmem %s6, %s302
      %p304 = pneg %p203
      %p305 = pneg %p200
      %p306 = scmp.lt.s32.totalorder %s20, 1
      %s307 = scalar_select %p306, %s20, 1
      %s308 = smul.addr %s307, 4
      %s309 = smul.addr %s308, 4
      %s310 = scalar_lea.vmem %s7, %s309
      %p311 = pneg %p229
      %p312 = pneg %p226
      %p313 = scmp.lt.s32.totalorder %s20, 1
      %s314 = scalar_select %p313, %s20, 1
      %s315 = smul.addr %s314, 2
      %s316 = smul.addr %s315, 4
      %s317 = scalar_lea.vmem %s8, %s316
      %p318 = scmp.lt.s32.totalorder %s20, 1
      %s319 = scalar_select %p318, %s20, 1
      %s320 = smul.addr %s319, 4
      %s321 = smul.addr %s320, 8
      %s322 = scalar_lea.vmem %s0, %s321
      %p323 = scmp.lt.s32.totalorder %s20, 1
      %s324 = scalar_select %p323, %s20, 1
      %s325 = smul.addr %s324, 4
      %s326 = smul.addr %s325, 4
      %s327 = scalar_lea.vmem %s5, %s326
      %p328 = scmp.lt.s32.totalorder %s20, 1
      %s329 = scalar_select %p328, %s20, 1
      %s330 = smul.addr %s329, 4
      %s331 = smul.addr %s330, 4
      %s332 = scalar_lea.vmem %s6, %s331
      %p333 = scmp.lt.s32.totalorder %s20, 1
      %s334 = scalar_select %p333, %s20, 1
      %s335 = smul.addr %s334, 4
      %s336 = smul.addr %s335, 4
      %s337 = scalar_lea.vmem %s7, %s336
      %p338 = scmp.lt.s32.totalorder %s20, 1
      %s339 = scalar_select %p338, %s20, 1
      %s340 = smul.addr %s339, 2
      %s341 = smul.addr %s340, 4
      %s342 = scalar_lea.vmem %s8, %s341
      %v344 = vld [vmem:[%s322] sm:$0xff]
      %v345 = vld [vmem:[%s322 + $0x8] sm:$0xff]
      %v346 = vld [vmem:[%s322 + $0x10] sm:$0xff]
      %v347 = vld [vmem:[%s322 + $0x18] sm:$0xff]
      %v348 = vpack.c.bf16 %v346, %v344
      %v349 = vpack.c.bf16 %v347, %v345
      %v350 = vld [vmem:[%s1] sm:$0xf]
      %v351 = vld [vmem:[%s1 + $0x4] sm:$0xf]
      %v352 = vld [vmem:[%s1 + $0x8] sm:$0xf]
      %v353 = vld [vmem:[%s1 + $0xc] sm:$0xf]
      %v354 = vld [vmem:[%s2] sm:$0xff]
      %v355 = vld [vmem:[%s2 + $0x8] sm:$0xff]
      %v356 = vld [vmem:[%s2 + $0x10] sm:$0xff]
      %v357 = vld [vmem:[%s2 + $0x18] sm:$0xff]
      %359 = vset.pattern.permute.xlu0 0
      %360 = vperm.xlu0 %359, %v354
      %v361 = vpop.permute.xlu0 %360
      %364 = vset.pattern.permute.xlu0 0
      %365 = vperm.xlu0 %364, %v355
      %v366 = vpop.permute.xlu0 %365
      %369 = vset.pattern.permute.xlu0 0
      %370 = vperm.xlu0 %369, %v356
      %v371 = vpop.permute.xlu0 %370
      %374 = vset.pattern.permute.xlu0 0
      %375 = vperm.xlu0 %374, %v357
      %v376 = vpop.permute.xlu0 %375
      %v382 = vunpack.c.l.b16 %v350
      %v383 = vunpack.c.l.b16 %v351
      %v384 = vunpack.c.l.b16 %v352
      %v385 = vunpack.c.l.b16 %v353
      %v386 = vpack.c.b16 %v383, %v382
      %v387 = vpack.c.b16 %v385, %v384
      %vm388 = vcmask 130048
      %v390 = vsel %vm388, %v386, 0
      %v393 = vsel %vm388, %v387, 0
      %395 = vmatprep.subr.bf16.mxu0 0
      %396 = vmatpush1.bf16.msra.mxu0 0
      %397 = vmatprep.subr.bf16.mxu0 0
      %398 = vmatpush1.bf16.msra.mxu0 0
      %399 = vmatprep.subr.bf16.mxu0 0
      %400 = vmatpush1.bf16.msra.mxu0 0
      %401 = vmatprep.subr.bf16.mxu0 0
      %402 = vmatpush1.bf16.msra.mxu0 0
      %403 = vmatprep.subr.bf16.mxu0 0
      %404 = vmatpush1.bf16.msra.mxu0 0
      %405 = vmatprep.subr.bf16.mxu0 0
      %406 = vmatpush1.bf16.msra.mxu0 0
      %407 = vmatprep.subr.bf16.mxu0 0
      %408 = vmatpush1.bf16.msra.mxu0 0
      %409 = vmatprep.subr.bf16.mxu0 %v349
      %410 = vmatpush1.bf16.msra.mxu0 %v348
      %411 = vmatprep.subr.bf16.mxu0 0
      %412 = vmatpush2.bf16.msra.mxu0 0
      %413 = vmatprep.subr.bf16.mxu0 0
      %414 = vmatpush2.bf16.msra.mxu0 0
      %415 = vmatprep.subr.bf16.mxu0 0
      %416 = vmatpush2.bf16.msra.mxu0 0
      %417 = vmatprep.subr.bf16.mxu0 0
      %418 = vmatpush2.bf16.msra.mxu0 0
      %419 = vmatprep.subr.bf16.mxu0 0
      %420 = vmatpush2.bf16.msra.mxu0 0
      %421 = vmatprep.subr.bf16.mxu0 0
      %422 = vmatpush2.bf16.msra.mxu0 0
      %423 = vmatprep.subr.bf16.mxu0 0
      %424 = vmatpush2.bf16.msra.mxu0 0
      %425 = vmatprep.subr.bf16.mxu0 0
      %426 = vmatpush2.bf16.msra.mxu0 0
      %427 = vmatprep.mubr.bf16.mxu0 0
      %428 = vmatmul.mubr.bf16.gmra.mxu0 %v390
      %v429 = vpop.f32.mrf.mxu0
      %v430 = vadd.f32 %v361, %v429
      %v431 = vpop.f32.mrf.mxu0
      %v432 = vadd.f32 %v361, %v431
      %v433 = vpop.f32.mrf.mxu0
      %v434 = vadd.f32 %v366, %v433
      %v435 = vpop.f32.mrf.mxu0
      %v436 = vadd.f32 %v366, %v435
      %437 = vmatprep.mubr.bf16.mxu0 0
      %438 = vmatmul.mubr.bf16.gmra.mxu0 %v393
      %v439 = vpop.f32.mrf.mxu0
      %v440 = vadd.f32 %v371, %v439
      %v441 = vpop.f32.mrf.mxu0
      %v442 = vadd.f32 %v371, %v441
      %v443 = vpop.f32.mrf.mxu0
      %v444 = vadd.f32 %v376, %v443
      %v445 = vpop.f32.mrf.mxu0
      %v446 = vadd.f32 %v376, %v445
      %447 = vdwg.mxu0
      %v448 = vpack.c.bf16 %v434, %v430
      %v449 = vpack.c.bf16 %v436, %v432
      %v452 = vunpack.c.l.b16 %v448
      %v453 = vunpack.c.l.b16 %v449
      %v454 = vunpack.c.h.b16 %v448
      %v455 = vunpack.c.h.b16 %v449
      %v456 = vpack.c.b16 %v453, %v452
      %v457 = vpack.c.b16 %v455, %v454
      %460 = vst [vmem:[%s327] sm:$0xff] %v456
      %461 = vst [vmem:[%s327 + $0x8] sm:$0xff] %v457
      %v462 = vpack.c.bf16 %v444, %v440
      %v463 = vpack.c.bf16 %v446, %v442
      %v466 = vunpack.c.l.b16 %v462
      %v467 = vunpack.c.l.b16 %v463
      %v468 = vunpack.c.h.b16 %v462
      %v469 = vunpack.c.h.b16 %v463
      %v470 = vpack.c.b16 %v467, %v466
      %v471 = vpack.c.b16 %v469, %v468
      %474 = vst [vmem:[%s332] sm:$0xff] %v470
      %475 = vst [vmem:[%s332 + $0x8] sm:$0xff] %v471
      %v476 = vld [vmem:[%s3] sm:$0xf]
      %v477 = vld [vmem:[%s3 + $0x4] sm:$0xf]
      %v478 = vld [vmem:[%s4] sm:$0xff]
      %v479 = vld [vmem:[%s4 + $0x8] sm:$0xff]
      %481 = vset.pattern.permute.xlu0 0
      %482 = vperm.xlu0 %481, %v478
      %v483 = vpop.permute.xlu0 %482
      %486 = vset.pattern.permute.xlu0 0
      %487 = vperm.xlu0 %486, %v479
      %v488 = vpop.permute.xlu0 %487
      %v492 = vunpack.c.l.b16 %v476
      %v493 = vunpack.c.l.b16 %v477
      %v494 = vpack.c.b16 %v493, %v492
      %v496 = vsel %vm388, %v494, 0
      %498 = vmatprep.subr.bf16.mxu0 0
      %499 = vmatpush1.bf16.msra.mxu0 0
      %500 = vmatprep.subr.bf16.mxu0 0
      %501 = vmatpush1.bf16.msra.mxu0 0
      %502 = vmatprep.subr.bf16.mxu0 0
      %503 = vmatpush1.bf16.msra.mxu0 0
      %504 = vmatprep.subr.bf16.mxu0 0
      %505 = vmatpush1.bf16.msra.mxu0 0
      %506 = vmatprep.subr.bf16.mxu0 0
      %507 = vmatpush1.bf16.msra.mxu0 0
      %508 = vmatprep.subr.bf16.mxu0 0
      %509 = vmatpush1.bf16.msra.mxu0 0
      %510 = vmatprep.subr.bf16.mxu0 0
      %511 = vmatpush1.bf16.msra.mxu0 0
      %512 = vmatprep.subr.bf16.mxu0 %v349
      %513 = vmatpush1.bf16.msra.mxu0 %v348
      %514 = vmatprep.subr.bf16.mxu0 0
      %515 = vmatpush2.bf16.msra.mxu0 0
      %516 = vmatprep.subr.bf16.mxu0 0
      %517 = vmatpush2.bf16.msra.mxu0 0
      %518 = vmatprep.subr.bf16.mxu0 0
      %519 = vmatpush2.bf16.msra.mxu0 0
      %520 = vmatprep.subr.bf16.mxu0 0
      %521 = vmatpush2.bf16.msra.mxu0 0
      %522 = vmatprep.subr.bf16.mxu0 0
      %523 = vmatpush2.bf16.msra.mxu0 0
      %524 = vmatprep.subr.bf16.mxu0 0
      %525 = vmatpush2.bf16.msra.mxu0 0
      %526 = vmatprep.subr.bf16.mxu0 0
      %527 = vmatpush2.bf16.msra.mxu0 0
      %528 = vmatprep.subr.bf16.mxu0 0
      %529 = vmatpush2.bf16.msra.mxu0 0
      %530 = vmatprep.mubr.bf16.mxu0 0
      %531 = vmatmul.mubr.bf16.gmra.mxu0 %v496
      %v532 = vpop.f32.mrf.mxu0
      %v533 = vadd.f32 %v483, %v532
      %v534 = vpop.f32.mrf.mxu0
      %v535 = vadd.f32 %v483, %v534
      %v536 = vpop.f32.mrf.mxu0
      %v537 = vadd.f32 %v488, %v536
      %v538 = vpop.f32.mrf.mxu0
      %v539 = vadd.f32 %v488, %v538
      %540 = vdwg.mxu0
      %v541 = vpack.c.bf16 %v537, %v533
      %v542 = vpack.c.bf16 %v539, %v535
      %v545 = vunpack.c.l.b16 %v541
      %v546 = vunpack.c.l.b16 %v542
      %v547 = vunpack.c.h.b16 %v541
      %v548 = vunpack.c.h.b16 %v542
      %v549 = vpack.c.b16 %v546, %v545
      %v550 = vpack.c.b16 %v548, %v547
      %553 = vst [vmem:[%s337] sm:$0xff] %v549
      %554 = vst [vmem:[%s337 + $0x8] sm:$0xff] %v550
      %555 = vmatprep.subr.mxu0 0.0
      %556 = vmatpush1.xpose.msra.mxu0 0.0
      %557 = vmatprep.subr.mxu0 0.0
      %558 = vmatpush1.xpose.msra.mxu0 0.0
      %559 = vmatprep.subr.mxu0 0.0
      %560 = vmatpush1.xpose.msra.mxu0 0.0
      %561 = vmatprep.subr.mxu0 0.0
      %562 = vmatpush1.xpose.msra.mxu0 0.0
      %563 = vmatprep.subr.mxu0 0.0
      %564 = vmatpush1.xpose.msra.mxu0 0.0
      %565 = vmatprep.subr.mxu0 0.0
      %566 = vmatpush1.xpose.msra.mxu0 0.0
      %567 = vmatprep.subr.mxu0 0.0
      %568 = vmatpush1.xpose.msra.mxu0 0.0
      %569 = vmatprep.subr.mxu0 0.0
      %570 = vmatpush1.xpose.msra.mxu0 0.0
      %571 = vmatprep.subr.mxu0 0.0
      %572 = vmatpush1.xpose.msra.mxu0 0.0
      %573 = vmatprep.subr.mxu0 0.0
      %574 = vmatpush1.xpose.msra.mxu0 0.0
      %575 = vmatprep.subr.mxu0 0.0
      %576 = vmatpush1.xpose.msra.mxu0 0.0
      %577 = vmatprep.subr.mxu0 0.0
      %578 = vmatpush1.xpose.msra.mxu0 0.0
      %579 = vmatprep.subr.mxu0 0.0
      %580 = vmatpush1.xpose.msra.mxu0 0.0
      %581 = vmatprep.subr.mxu0 0.0
      %582 = vmatpush1.xpose.msra.mxu0 0.0
      %583 = vmatprep.subr.mxu0 %v347
      %584 = vmatpush1.xpose.msra.mxu0 %v346
      %585 = vmatprep.subr.mxu0 %v345
      %586 = vmatpush1.xpose.msra.mxu0 %v344
      %587 = vmatprep.subr.mxu0 0.0
      %588 = vmatpush2.xpose.msra.mxu0 0.0
      %589 = vmatprep.subr.mxu0 0.0
      %590 = vmatpush2.xpose.msra.mxu0 0.0
      %591 = vmatprep.subr.mxu0 0.0
      %592 = vmatpush2.xpose.msra.mxu0 0.0
      %593 = vmatprep.subr.mxu0 0.0
      %594 = vmatpush2.xpose.msra.mxu0 0.0
      %595 = vmatprep.subr.mxu0 0.0
      %596 = vmatpush2.xpose.msra.mxu0 0.0
      %597 = vmatprep.subr.mxu0 0.0
      %598 = vmatpush2.xpose.msra.mxu0 0.0
      %599 = vmatprep.subr.mxu0 0.0
      %600 = vmatpush2.xpose.msra.mxu0 0.0
      %601 = vmatprep.subr.mxu0 0.0
      %602 = vmatpush2.xpose.msra.mxu0 0.0
      %603 = vmatprep.subr.mxu0 0.0
      %604 = vmatpush2.xpose.msra.mxu0 0.0
      %605 = vmatprep.subr.mxu0 0.0
      %606 = vmatpush2.xpose.msra.mxu0 0.0
      %607 = vmatprep.subr.mxu0 0.0
      %608 = vmatpush2.xpose.msra.mxu0 0.0
      %609 = vmatprep.subr.mxu0 0.0
      %610 = vmatpush2.xpose.msra.mxu0 0.0
      %611 = vmatprep.subr.mxu0 0.0
      %612 = vmatpush2.xpose.msra.mxu0 0.0
      %613 = vmatprep.subr.mxu0 0.0
      %614 = vmatpush2.xpose.msra.mxu0 0.0
      %615 = vmatprep.subr.mxu0 0.0
      %616 = vmatpush2.xpose.msra.mxu0 0.0
      %617 = vmatprep.subr.mxu0 0.0
      %618 = vmatpush2.xpose.msra.mxu0 0.0
      %619 = vmatprep.mubr.f32.mxu0 %v345
      %620 = vmatmul.mubr.f32.gmra.mxu0 %v344
      %v621 = vpop.f32.mrf.mxu0
      %v622 = vadd.f32 0.0, %v621
      %v623 = vpop.f32.mrf.mxu0
      %624 = vmatprep.mubr.f32.mxu0 %v347
      %625 = vmatmul.mubr.f32.gmra.mxu0 %v346
      %v626 = vpop.f32.mrf.mxu0
      %v627 = vadd.f32 0.0, %v626
      %v628 = vpop.f32.mrf.mxu0
      %629 = vdwg.mxu0
      %v630 = vsel %vm388, %v622, inf
      %631 = vmin.xlane.f32.xlu0 %v630
      %v632 = vpop.xlane.xlu0 %631
      %v633 = vsel %vm388, %v627, inf
      %634 = vmin.xlane.f32.xlu0 %v633
      %v635 = vpop.xlane.xlu0 %634
      %v636 = vsub.f32 %v632, %v622
      %v637 = vsub.f32 %v635, %v627
      %v638 = vmul.f32 %v636, 1.442695
      %v639 = vpow.pop %v638
      %v640 = vmul.f32 %v637, 1.442695
      %v641 = vpow.pop %v640
      %v642 = vsel %vm388, %v639, 0.0
      %643 = vadd.xlane.f32.xlu0 %v642
      %v644 = vpop.xlane.xlu0 %643
      %v645 = vsel %vm388, %v641, 0.0
      %646 = vadd.xlane.f32.xlu0 %v645
      %v647 = vpop.xlane.xlu0 %646
      %v648 = vrcp.pop %v644
      %v649 = vrcp.pop %v647
      %v650 = vmul.f32 %v639, %v648
      %v651 = vmul.f32 %v641, %v649
      %v652 = vpack.c.bf16 %v651, %v650
      %v654 = vunpack.c.l.b16 %v652
      %v655 = vunpack.c.h.b16 %v652
      %v656 = vpack.c.b16 %v654, %v654
      %v657 = vpack.c.b16 %v655, %v655
      %vm660 = vcmask 125952
      %661 = vst.msk [vmem:[%s342] sm:$0xf] %vm660, %v656
      %662 = vst.msk [vmem:[%s342 + $0x4] sm:$0xf] %vm660, %v657
      %p663 = scmp.lt.s32.totalorder %s20, 1
      %s664 = scalar_select %p663, %s20, 1
      %s665 = smul.addr %s664, 4
      %s666 = smul.addr %s665, 4
      %s667 = scalar_lea.vmem %s5, %s666
      %p668 = scmp.lt.s32.totalorder %s20, 1
      %s669 = scalar_select %p668, %s20, 1
      %s670 = smul.addr %s669, 4
      %s671 = smul.addr %s670, 4
      %s672 = scalar_lea.vmem %s6, %s671
      %p673 = scmp.lt.s32.totalorder %s20, 1
      %s674 = scalar_select %p673, %s20, 1
      %s675 = smul.addr %s674, 4
      %s676 = smul.addr %s675, 4
      %s677 = scalar_lea.vmem %s7, %s676
      %p678 = scmp.lt.s32.totalorder %s20, 1
      %s679 = scalar_select %p678, %s20, 1
      %s680 = smul.addr %s679, 2
      %s681 = smul.addr %s680, 4
      %s682 = scalar_lea.vmem %s8, %s681
      // Predicated region
      $region41: #{pam_cam_layer.2} parent=39 // pred_check
        %p683 = pneg %p148
      $region42: #{pam_cam_layer.2} parent=39 // pred_check_branch
        %685 = sbr.rel (%p683) target = $region44
      $region43: #{pam_cam_layer.2} parent=39 // pred_region
        _
      $region44: #{pam_cam_layer.2} parent=39 // pred_fallthru
        _
      // Predicated region
      $region45: #{pam_cam_layer.2} parent=39 // pred_check
        %p686 = pneg %p174
      $region46: #{pam_cam_layer.2} parent=39 // pred_check_branch
        %688 = sbr.rel (%p686) target = $region48
      $region47: #{pam_cam_layer.2} parent=39 // pred_region
        _
      $region48: #{pam_cam_layer.2} parent=39 // pred_fallthru
        _
      // Predicated region
      $region49: #{pam_cam_layer.2} parent=39 // pred_check
        %p689 = pneg %p200
      $region50: #{pam_cam_layer.2} parent=39 // pred_check_branch
        %691 = sbr.rel (%p689) target = $region52
      $region51: #{pam_cam_layer.2} parent=39 // pred_region
        _
      $region52: #{pam_cam_layer.2} parent=39 // pred_fallthru
        _
      // Predicated region
      $region53: #{pam_cam_layer.2} parent=39 // pred_check
        %p692 = pneg %p226
      $region54: #{pam_cam_layer.2} parent=39 // pred_check_branch
        %694 = sbr.rel (%p692) target = $region56
      $region55: #{pam_cam_layer.2} parent=39 // pred_region
        _
      $region56: #{pam_cam_layer.2} parent=39 // pred_fallthru
        _
    $region40: #{pam_cam_layer.2} parent=5 // pred_fallthru
      _
    %p695 = scmp.le.s32.totalorder 2, %s15
    // Predicated region
    $region57: #{pam_cam_layer.2} parent=5 // pred_check
      %p696 = pneg %p695
    $region58: #{pam_cam_layer.2} parent=5 // pred_check_branch
      %698 = sbr.rel (%p696) target = $region60
    $region59: #{pam_cam_layer.2} parent=5 // pred_region
      %s699 = ssub.s32 %s15, 2
      // Predicated region
      $region61: #{pam_cam_layer.2} parent=59 // pred_check
        %p700 = pneg %p154
      $region62: #{pam_cam_layer.2} parent=59 // pred_check_branch
        %702 = sbr.rel (%p700) target = $region64
      $region63: #{pam_cam_layer.2} parent=59 // pred_region
        %p703 = scmp.lt.s32.totalorder %s21, 1
        %s704 = scalar_select %p703, %s21, 1
        %s705 = smul.addr %s704, 4
        %s706 = smul.addr %s705, 4
        %s707 = scalar_lea.vmem %s5, %s706
      $region64: #{pam_cam_layer.2} parent=59 // pred_fallthru
        _
      // Predicated region
      $region65: #{pam_cam_layer.2} parent=59 // pred_check
        %p708 = pneg %p180
      $region66: #{pam_cam_layer.2} parent=59 // pred_check_branch
        %710 = sbr.rel (%p708) target = $region68
      $region67: #{pam_cam_layer.2} parent=59 // pred_region
        %p711 = scmp.lt.s32.totalorder %s21, 1
        %s712 = scalar_select %p711, %s21, 1
        %s713 = smul.addr %s712, 4
        %s714 = smul.addr %s713, 4
        %s715 = scalar_lea.vmem %s6, %s714
      $region68: #{pam_cam_layer.2} parent=59 // pred_fallthru
        _
      // Predicated region
      $region69: #{pam_cam_layer.2} parent=59 // pred_check
        %p716 = pneg %p206
      $region70: #{pam_cam_layer.2} parent=59 // pred_check_branch
        %718 = sbr.rel (%p716) target = $region72
      $region71: #{pam_cam_layer.2} parent=59 // pred_region
        %p719 = scmp.lt.s32.totalorder %s21, 1
        %s720 = scalar_select %p719, %s21, 1
        %s721 = smul.addr %s720, 4
        %s722 = smul.addr %s721, 4
        %s723 = scalar_lea.vmem %s7, %s722
      $region72: #{pam_cam_layer.2} parent=59 // pred_fallthru
        _
      // Predicated region
      $region73: #{pam_cam_layer.2} parent=59 // pred_check
        %p724 = pneg %p232
      $region74: #{pam_cam_layer.2} parent=59 // pred_check_branch
        %726 = sbr.rel (%p724) target = $region76
      $region75: #{pam_cam_layer.2} parent=59 // pred_region
        %p727 = scmp.lt.s32.totalorder %s21, 1
        %s728 = scalar_select %p727, %s21, 1
        %s729 = smul.addr %s728, 2
        %s730 = smul.addr %s729, 4
        %s731 = scalar_lea.vmem %s8, %s730
      $region76: #{pam_cam_layer.2} parent=59 // pred_fallthru
        _
    $region60: #{pam_cam_layer.2} parent=5 // pred_fallthru
      _
  $region6: #{pam_cam_layer.2} parent=0 // loop_footer
    %s19 = sadd.s32 1, %s15
  $region7: #{pam_cam_layer.2} parent=0 // loop_footer_branch
    %14 = sbr.rel target = $region3
  $region8: #{pam_cam_layer.2} parent=0 // loop_exit
    _

</llo_original>
